<compile_context>
chip_gen: v6e
topology: v6e:2x2x1
jax: 0.10.0
libtpu: 0.0.40
codegen_flags: <defaults>
</compile_context>

<pallas_src>
import functools

import jax
import jax.numpy as jnp
from jax import lax
from jax.experimental import pallas as pl
from jax.experimental.pallas import tpu as pltpu


def bilstm_tagger_kernel(x_ref,      # [T*Bt, E]    bf16  time-major embedded block
                         wih_ref,    # [E, 8H]      bf16  [w_ih_fwd | w_ih_bwd] columns
                         bih_ref,    # [1, 8H]      f32   [b_fwd | b_bwd] (b_ih + b_hh pre-summed)
                         whhf_ref,   # [H, 4H]      bf16  forward recurrent weight
                         whhb_ref,   # [H, 4H]      bf16  backward recurrent weight
                         wfc_ref,    # [2H, Opad]   bf16  fc weight (rows 0:H fwd, H:2H bwd)
                         bfc_ref,    # [1, Opad]    f32
                         out_ref,    # [T*Bt, Opad] f32   lane-dense logits
                         xg_buf,     # [T*Bt, 8H]   bf16  scratch: hoisted input-gate preacts
                         h_buf,      # [T*Bt, 2H]   bf16  scratch: fwd|bwd hidden states
                         *, seq_len, batch):
    T, B = seq_len, batch
    H = whhf_ref.shape[0]
    H4 = 4 * H
    f32 = jnp.float32
    bf16 = jnp.bfloat16

    # ---- Phase 1: both directions' input projections as ONE MXU matmul ----
    xg = jnp.dot(x_ref[...], wih_ref[...], preferred_element_type=f32) + bih_ref[...]
    xg_buf[...] = xg.astype(bf16)

    # ---- Phase 2: bidirectional recurrence ----
    whh_f = whhf_ref[...]
    whh_b = whhb_ref[...]

    def activate(gates):  # gates: [B, 4H] f32, PyTorch gate order i | f | g | o
        if H4 <= 128:
            # All four gates share one 128-lane vreg: one sigmoid pass + one
            # tanh pass over the whole vreg, slice afterwards.
            sg = jax.nn.sigmoid(gates)
            th = jnp.tanh(gates)
            return sg[:, :H], sg[:, H:2 * H], th[:, 2 * H:3 * H], sg[:, 3 * H:]
        # Production H: transcendentals only on the lanes that need them
        # (EUP is the per-step latency chain of the LSTM cell).
        i_f = jax.nn.sigmoid(gates[:, :2 * H])
        g = jnp.tanh(gates[:, 2 * H:3 * H])
        o = jax.nn.sigmoid(gates[:, 3 * H:])
        return i_f[:, :H], i_f[:, H:], g, o

    def step(t, carry):
        hf, cf, hb, cb = carry
        tb = T - 1 - t
        rf = t * B          # fwd row block
        rb = tb * B         # bwd row block

        # Two independent per-direction recurrent matmuls (no concat, no zero
        # block); the fwd/bwd chains are independent so they interleave.
        gates_f = (jnp.dot(hf.astype(bf16), whh_f, preferred_element_type=f32)
                   + xg_buf[pl.ds(rf, B), :H4])
        gates_b = (jnp.dot(hb.astype(bf16), whh_b, preferred_element_type=f32)
                   + xg_buf[pl.ds(rb, B), H4:])

        i_f, f_f, g_f, o_f = activate(gates_f)
        cf = f_f * cf + i_f * g_f
        hf = o_f * jnp.tanh(cf)

        i_b, f_b, g_b, o_b = activate(gates_b)
        cb = f_b * cb + i_b * g_b
        hb = o_b * jnp.tanh(cb)

        # Combined hidden buffer: fwd in lanes [0:H), bwd in lanes [H:2H).
        h_buf[pl.ds(rf, B), :H] = hf.astype(bf16)
        h_buf[pl.ds(rb, B), H:] = hb.astype(bf16)
        return hf, cf, hb, cb

    z = jnp.zeros((B, H), f32)
    carry = (z, z, z, z)
    if T <= 32:
        # Small T (demo): full unroll with Python-constant row offsets.
        for t in range(T):
            carry = step(t, carry)
    else:
        # Production T: capped unroll is enough to hide MXU/EUP latency across
        # the two independent chains without bloating program memory.
        carry = lax.fori_loop(0, T, step, carry, unroll=4)

    # ---- Phase 3: single FC matmul on the combined hidden buffer ----
    out_ref[...] = (jnp.dot(h_buf[...], wfc_ref[...], preferred_element_type=f32)
                    + bfc_ref[...])


def pack_params(params, lane=128):
    """Repack natural-layout params into the kernel layouts.  Call ONCE per
    model (hoisted out of the forward path)."""
    H = params["w_hh_f"].shape[0]
    O = params["w_fc"].shape[1]
    o_pad = ((O + lane - 1) // lane) * lane
    bf16 = jnp.bfloat16
    # NOTE (PyTorch import footgun): real nn.LSTM weights are [4H, E]/[4H, H]
    # and have two biases; transpose them and sum bias_ih + bias_hh first.
    return {
        "embedding": params["embedding"],
        "w_ih": jnp.concatenate([params["w_ih_f"], params["w_ih_b"]], axis=1).astype(bf16),
        "b_ih": jnp.concatenate([params["b_f"], params["b_b"]], axis=1).astype(jnp.float32),
        "w_hh_f": params["w_hh_f"].astype(bf16),
        "w_hh_b": params["w_hh_b"].astype(bf16),
        "w_fc": jnp.zeros((2 * H, o_pad), jnp.float32).at[:, :O].set(params["w_fc"]).astype(bf16),
        "b_fc": jnp.zeros((1, o_pad), jnp.float32).at[:, :O].set(params["b_fc"]),
    }


def bilstm_pos_tagger(text, packed, output_dim):
    """text: [T, B] int32 token ids -> logits [T, B, output_dim] float32."""
    emb_tbl = packed["embedding"]
    w_ih, b_ih = packed["w_ih"], packed["b_ih"]
    whh_f, whh_b = packed["w_hh_f"], packed["w_hh_b"]
    w_fc, b_fc = packed["w_fc"], packed["b_fc"]

    T, B = text.shape
    E = emb_tbl.shape[1]
    H = whh_f.shape[0]
    o_pad = w_fc.shape[1]
    assert H % 32 == 0, "lane-aligned gate slicing assumes H % 32 == 0"

    # TODO(synk): fuse this gather into the kernel (scalar-prefetch `text` +
    # DMA row gather from the HBM-resident table) instead of materializing
    # [T, B, E] in HBM and re-reading it.
    x = jnp.take(emb_tbl, text, axis=0).astype(jnp.bfloat16)        # [T, B, E]

    # Batch tiling: each tile runs an independent recurrence, so the grid axis
    # is "parallel" (megacore sharding on v7x, bounded per-step VMEM, pipelined
    # x/out DMA).  Small / ragged batches degenerate to a single tile.
    bt = 8 if (B % 8 == 0 and B > 8) else B
    nb = B // bt
    x = x.reshape(T, nb, bt, E).transpose(1, 0, 2, 3).reshape(nb, T * bt, E)

    blk = T * bt
    resident = (2 * blk * E * 2 + 2 * blk * o_pad * 4        # double-buffered x / out blocks
                + blk * 8 * H * 2 + blk * 2 * H * 2          # bf16 scratch slabs
                + E * 8 * H * 2 + 2 * H * 4 * H * 2          # w_ih, w_hh_f/b
                + 2 * H * o_pad * 2 + 8 * H * 4 + o_pad * 4)  # w_fc, biases
    vmem_limit = int(min(112 * 2 ** 20, max(32 * 2 ** 20, 2 * resident)))
    # TODO(synk): on v7x (64 MiB VMEM) clamp to ~48 MiB and chunk T with
    # emit_pipeline over time windows instead of growing the resident slabs.

    kernel = functools.partial(bilstm_tagger_kernel, seq_len=T, batch=bt)
    const2 = lambda j: (0, 0)
    out = pl.pallas_call(
        kernel,
        out_shape=jax.ShapeDtypeStruct((nb, blk, o_pad), jnp.float32),
        grid=(nb,),
        in_specs=[
            pl.BlockSpec((None, blk, E), lambda j: (j, 0, 0)),
            pl.BlockSpec(w_ih.shape, const2),
            pl.BlockSpec(b_ih.shape, const2),
            pl.BlockSpec(whh_f.shape, const2),
            pl.BlockSpec(whh_b.shape, const2),
            pl.BlockSpec(w_fc.shape, const2),
            pl.BlockSpec(b_fc.shape, const2),
        ],
        out_specs=pl.BlockSpec((None, blk, o_pad), lambda j: (j, 0, 0)),
        scratch_shapes=[
            pltpu.VMEM((blk, 8 * H), jnp.bfloat16),
            pltpu.VMEM((blk, 2 * H), jnp.bfloat16),
        ],
        compiler_params=pltpu.CompilerParams(
            dimension_semantics=("parallel",),
            vmem_limit_bytes=vmem_limit,
        ),
    )(x, w_ih, b_ih, whh_f, whh_b, w_fc, b_fc)

    out = out.reshape(nb, T, bt, o_pad).transpose(1, 0, 2, 3).reshape(T, B, o_pad)
    # TODO(synk): emit bf16 logits (or fuse the argmax) when only tag ids are needed.
    return out[:, :, :output_dim]


def init_params(key, vocab_size, emb_dim, hidden_dim, output_dim, pad_idx):
    ks = jax.random.split(key, 9)
    scale = 0.1

    def rnd(k, shape):
        return (scale * jax.random.normal(k, shape)).astype(jnp.float32)

    emb = rnd(ks[0], (vocab_size, emb_dim))
    emb = emb.at[pad_idx].set(0.0)                   # padding_idx row is zeros

    H4 = 4 * hidden_dim
    return {
        "embedding": emb,
        # stored pre-transposed relative to PyTorch ([4H,E] -> [E,4H] etc.)
        "w_ih_f": rnd(ks[1], (emb_dim, H4)),
        "w_hh_f": rnd(ks[2], (hidden_dim, H4)),
        "b_f":    rnd(ks[3], (1, H4)),               # b_ih + b_hh combined
        "w_ih_b": rnd(ks[4], (emb_dim, H4)),
        "w_hh_b": rnd(ks[5], (hidden_dim, H4)),
        "b_b":    rnd(ks[6], (1, H4)),
        "w_fc":   rnd(ks[7], (2 * hidden_dim, output_dim)),
        "b_fc":   rnd(ks[8], (1, output_dim)),
    }


def reference_forward(text, params):
    """Pure-JAX reference of the same math (mirrors the kernel's bf16 matmul
    operands and bf16 gate/hidden scratch rounding) for a correctness check."""
    emb = jnp.take(params["embedding"], text, axis=0)       # [T, B, E]
    T, B, E = emb.shape
    H = params["w_hh_f"].shape[0]
    bf16 = jnp.bfloat16
    x = emb.astype(bf16)

    def run_dir(wih, whh, b, reverse):
        wih = wih.astype(bf16)
        whh = whh.astype(bf16)
        h = jnp.zeros((B, H), jnp.float32)
        c = jnp.zeros((B, H), jnp.float32)
        outs = [None] * T
        order = range(T - 1, -1, -1) if reverse else range(T)
        for t in order:
            xg = (jnp.dot(x[t], wih, preferred_element_type=jnp.float32) + b).astype(bf16)
            gates = (xg.astype(jnp.float32)
                     + jnp.dot(h.astype(bf16), whh, preferred_element_type=jnp.float32))
            i = jax.nn.sigmoid(gates[:, :H])
            f = jax.nn.sigmoid(gates[:, H:2 * H])
            g = jnp.tanh(gates[:, 2 * H:3 * H])
            o = jax.nn.sigmoid(gates[:, 3 * H:])
            c = f * c + i * g
            h = o * jnp.tanh(c)
            outs[t] = h
        return jnp.stack(outs)                               # [T, B, H] f32

    of = run_dir(params["w_ih_f"], params["w_hh_f"], params["b_f"], False).astype(bf16)
    ob = run_dir(params["w_ih_b"], params["w_hh_b"], params["b_b"], True).astype(bf16)
    wfc = params["w_fc"].astype(bf16)
    return (jnp.dot(of, wfc[:H], preferred_element_type=jnp.float32)
            + jnp.dot(ob, wfc[H:], preferred_element_type=jnp.float32)
            + params["b_fc"])


if __name__ == "__main__":
    base_key = jax.random.PRNGKey(0)

    def run_case(case_idx, *, seq_len, batch, vocab, emb_dim, hidden, out_dim, pad_idx=0):
        key = jax.random.fold_in(base_key, case_idx)
        k_param, k_text = jax.random.split(key)
        params = init_params(k_param, vocab, emb_dim, hidden, out_dim, pad_idx)
        packed = pack_params(params)          # hoisted: done once, not per forward
        text = jax.random.randint(k_text, (seq_len, batch), 0, vocab, dtype=jnp.int32)
        pred = jax.block_until_ready(bilstm_pos_tagger(text, packed, out_dim))
        ref = reference_forward(text, params)
        assert pred.shape == (seq_len, batch, out_dim)
        err = float(jnp.max(jnp.abs(pred - ref)))
        assert jnp.allclose(pred, ref, atol=1e-2, rtol=1e-2), f"case {case_idx}: max err {err}"

    # Shapes consistent with the module: vocab=50, embedding_dim=32,
    # hidden_dim=32, output_dim=10, n_layers=1, bidirectional=True, pad_idx=0,
    # seq_len=8, batch=2.
    run_case(0, seq_len=8, batch=2, vocab=50, emb_dim=32, hidden=32, out_dim=10)
    # Extra coverage: batch-tiled "parallel" grid path (B=16 -> two tiles of 8).
    run_case(1, seq_len=8, batch=16, vocab=50, emb_dim=32, hidden=32, out_dim=10)
    # Extra coverage: 4H > 128 -> narrowed per-gate transcendental path.
    run_case(2, seq_len=8, batch=2, vocab=50, emb_dim=32, hidden=64, out_dim=10)

    print("KERNEL_OK")
</pallas_src>

<mosaic_0001>
module attributes {stable_mosaic.version = 11 : i64} {
  func.func @bilstm_tagger_kernel(%arg0: i32, %arg1: memref<1x16x32xbf16, #tpu.memory_space<vmem>>, %arg2: memref<32x256xbf16, #tpu.memory_space<vmem>>, %arg3: memref<1x256xf32, #tpu.memory_space<vmem>>, %arg4: memref<32x128xbf16, #tpu.memory_space<vmem>>, %arg5: memref<32x128xbf16, #tpu.memory_space<vmem>>, %arg6: memref<64x128xbf16, #tpu.memory_space<vmem>>, %arg7: memref<1x128xf32, #tpu.memory_space<vmem>>, %arg8: memref<1x16x128xf32, #tpu.memory_space<vmem>>, %arg9: memref<16x256xbf16, #tpu.memory_space<vmem>>, %arg10: memref<16x64xbf16, #tpu.memory_space<vmem>>) attributes {dimension_semantics = [#tpu.dimension_semantics<parallel>], iteration_bounds = array<i64: 1>, scalar_prefetch = 0 : i64, scratch_operands = 2 : i64, tpu.core_type = #tpu.core_type<tc>, window_params = [{transform_indices = @transform_0, window_bounds = array<i64: 1, 16, 32>}, {pipeline_mode = #tpu.pipeline_mode<synchronous>, transform_indices = @transform_1, window_bounds = array<i64: 32, 256>}, {pipeline_mode = #tpu.pipeline_mode<synchronous>, transform_indices = @transform_2, window_bounds = array<i64: 1, 256>}, {pipeline_mode = #tpu.pipeline_mode<synchronous>, transform_indices = @transform_3, window_bounds = array<i64: 32, 128>}, {pipeline_mode = #tpu.pipeline_mode<synchronous>, transform_indices = @transform_4, window_bounds = array<i64: 32, 128>}, {pipeline_mode = #tpu.pipeline_mode<synchronous>, transform_indices = @transform_5, window_bounds = array<i64: 64, 128>}, {pipeline_mode = #tpu.pipeline_mode<synchronous>, transform_indices = @transform_6, window_bounds = array<i64: 1, 128>}, {transform_indices = @transform_7, window_bounds = array<i64: 1, 16, 128>}]} {
    %c0 = arith.constant 0 : index
    %c0_0 = arith.constant 0 : index
    %c0_1 = arith.constant 0 : index
    %0 = vector.load %arg1[%c0, %c0_0, %c0_1] : memref<1x16x32xbf16, #tpu.memory_space<vmem>>, vector<1x16x32xbf16>
    %1 = vector.shape_cast %0 : vector<1x16x32xbf16> to vector<16x32xbf16>
    %c0_2 = arith.constant 0 : index
    %c0_3 = arith.constant 0 : index
    %2 = vector.load %arg2[%c0_2, %c0_3] : memref<32x256xbf16, #tpu.memory_space<vmem>>, vector<32x256xbf16>
    %cst = arith.constant dense<0.000000e+00> : vector<16x256xf32>
    %3 = tpu.matmul %1, %2, %cst {dimension_numbers = #tpu.dot_dimension_numbers<[1], [0], [0], [1], [0, 0, 1, 1], [], []>} : vector<16x32xbf16>, vector<32x256xbf16>, vector<16x256xf32> -> vector<16x256xf32>
    %c0_4 = arith.constant 0 : index
    %c0_5 = arith.constant 0 : index
    %4 = vector.load %arg3[%c0_4, %c0_5] : memref<1x256xf32, #tpu.memory_space<vmem>>, vector<1x256xf32>
    %5 = vector.broadcast %4 : vector<1x256xf32> to vector<16x256xf32>
    %6 = arith.addf %3, %5 : vector<16x256xf32>
    %7 = arith.truncf %6 : vector<16x256xf32> to vector<16x256xbf16>
    %c0_6 = arith.constant 0 : index
    %c0_7 = arith.constant 0 : index
    %8 = vector.load %arg9[%c0_6, %c0_7] : memref<16x256xbf16, #tpu.memory_space<vmem>>, vector<16x256xbf16>
    tpu.vector_store %arg9[%c0_6, %c0_7], %7 {strides = array<i32>} : memref<16x256xbf16, #tpu.memory_space<vmem>>, vector<16x256xbf16>,
    %c0_8 = arith.constant 0 : index
    %c0_9 = arith.constant 0 : index
    %9 = vector.load %arg4[%c0_8, %c0_9] : memref<32x128xbf16, #tpu.memory_space<vmem>>, vector<32x128xbf16>
    %c0_10 = arith.constant 0 : index
    %c0_11 = arith.constant 0 : index
    %10 = vector.load %arg5[%c0_10, %c0_11] : memref<32x128xbf16, #tpu.memory_space<vmem>>, vector<32x128xbf16>
    %cst_12 = arith.constant 0.000000e+00 : f32
    %11 = vector.broadcast %cst_12 : f32 to vector<2x32xf32>
    %12 = arith.truncf %11 : vector<2x32xf32> to vector<2x32xbf16>
    %cst_13 = arith.constant dense<0.000000e+00> : vector<2x128xf32>
    %13 = tpu.matmul %12, %9, %cst_13 {dimension_numbers = #tpu.dot_dimension_numbers<[1], [0], [0], [1], [0, 0, 1, 1], [], []>} : vector<2x32xbf16>, vector<32x128xbf16>, vector<2x128xf32> -> vector<2x128xf32>
    %c0_14 = arith.constant 0 : index
    %c0_15 = arith.constant 0 : index
    %14 = vector.load %arg9[%c0_14, %c0_15] : memref<16x256xbf16, #tpu.memory_space<vmem>>, vector<2x128xbf16>
    %15 = arith.extf %14 : vector<2x128xbf16> to vector<2x128xf32>
    %16 = arith.addf %13, %15 : vector<2x128xf32>
    %17 = arith.truncf %11 : vector<2x32xf32> to vector<2x32xbf16>
    %cst_16 = arith.constant dense<0.000000e+00> : vector<2x128xf32>
    %18 = tpu.matmul %17, %10, %cst_16 {dimension_numbers = #tpu.dot_dimension_numbers<[1], [0], [0], [1], [0, 0, 1, 1], [], []>} : vector<2x32xbf16>, vector<32x128xbf16>, vector<2x128xf32> -> vector<2x128xf32>
    %c14 = arith.constant 14 : index
    %c128 = arith.constant 128 : index
    %19 = vector.load %arg9[%c14, %c128] : memref<16x256xbf16, #tpu.memory_space<vmem>>, vector<2x128xbf16>
    %20 = arith.extf %19 : vector<2x128xbf16> to vector<2x128xf32>
    %21 = arith.addf %18, %20 : vector<2x128xf32>
    %22 = arith.negf %16 : vector<2x128xf32>
    %23 = math.exp %22 : vector<2x128xf32>
    %cst_17 = arith.constant 1.000000e+00 : f32
    %24 = vector.broadcast %cst_17 : f32 to vector<2x128xf32>
    %25 = arith.addf %24, %23 : vector<2x128xf32>
    %26 = arith.divf %24, %25 : vector<2x128xf32>
    %27 = math.tanh %16 : vector<2x128xf32>
    %28 = vector.extract_strided_slice %26 {offsets = [0, 0], sizes = [2, 32], strides = [1, 1]} : vector<2x128xf32> to vector<2x32xf32>
    %29 = vector.extract_strided_slice %26 {offsets = [0, 32], sizes = [2, 32], strides = [1, 1]} : vector<2x128xf32> to vector<2x32xf32>
    %30 = vector.extract_strided_slice %27 {offsets = [0, 64], sizes = [2, 32], strides = [1, 1]} : vector<2x128xf32> to vector<2x32xf32>
    %31 = vector.extract_strided_slice %26 {offsets = [0, 96], sizes = [2, 32], strides = [1, 1]} : vector<2x128xf32> to vector<2x32xf32>
    %32 = arith.mulf %29, %11 : vector<2x32xf32>
    %33 = arith.mulf %28, %30 : vector<2x32xf32>
    %34 = arith.addf %32, %33 : vector<2x32xf32>
    %35 = math.tanh %34 : vector<2x32xf32>
    %36 = arith.mulf %31, %35 : vector<2x32xf32>
    %37 = arith.negf %21 : vector<2x128xf32>
    %38 = math.exp %37 : vector<2x128xf32>
    %cst_18 = arith.constant 1.000000e+00 : f32
    %39 = vector.broadcast %cst_18 : f32 to vector<2x128xf32>
    %40 = arith.addf %39, %38 : vector<2x128xf32>
    %41 = arith.divf %39, %40 : vector<2x128xf32>
    %42 = math.tanh %21 : vector<2x128xf32>
    %43 = vector.extract_strided_slice %41 {offsets = [0, 0], sizes = [2, 32], strides = [1, 1]} : vector<2x128xf32> to vector<2x32xf32>
    %44 = vector.extract_strided_slice %41 {offsets = [0, 32], sizes = [2, 32], strides = [1, 1]} : vector<2x128xf32> to vector<2x32xf32>
    %45 = vector.extract_strided_slice %42 {offsets = [0, 64], sizes = [2, 32], strides = [1, 1]} : vector<2x128xf32> to vector<2x32xf32>
    %46 = vector.extract_strided_slice %41 {offsets = [0, 96], sizes = [2, 32], strides = [1, 1]} : vector<2x128xf32> to vector<2x32xf32>
    %47 = arith.mulf %44, %11 : vector<2x32xf32>
    %48 = arith.mulf %43, %45 : vector<2x32xf32>
    %49 = arith.addf %47, %48 : vector<2x32xf32>
    %50 = math.tanh %49 : vector<2x32xf32>
    %51 = arith.mulf %46, %50 : vector<2x32xf32>
    %52 = arith.truncf %36 : vector<2x32xf32> to vector<2x32xbf16>
    %c0_19 = arith.constant 0 : index
    %c0_20 = arith.constant 0 : index
    %53 = vector.load %arg10[%c0_19, %c0_20] : memref<16x64xbf16, #tpu.memory_space<vmem>>, vector<2x32xbf16>
    tpu.vector_store %arg10[%c0_19, %c0_20], %52 {strides = array<i32>} : memref<16x64xbf16, #tpu.memory_space<vmem>>, vector<2x32xbf16>,
    %54 = arith.truncf %51 : vector<2x32xf32> to vector<2x32xbf16>
    %c14_21 = arith.constant 14 : index
    %c32 = arith.constant 32 : index
    %55 = vector.load %arg10[%c14_21, %c32] : memref<16x64xbf16, #tpu.memory_space<vmem>>, vector<2x32xbf16>
    tpu.vector_store %arg10[%c14_21, %c32], %54 {strides = array<i32>} : memref<16x64xbf16, #tpu.memory_space<vmem>>, vector<2x32xbf16>,
    %56 = arith.truncf %36 : vector<2x32xf32> to vector<2x32xbf16>
    %cst_22 = arith.constant dense<0.000000e+00> : vector<2x128xf32>
    %57 = tpu.matmul %56, %9, %cst_22 {dimension_numbers = #tpu.dot_dimension_numbers<[1], [0], [0], [1], [0, 0, 1, 1], [], []>} : vector<2x32xbf16>, vector<32x128xbf16>, vector<2x128xf32> -> vector<2x128xf32>
    %c2 = arith.constant 2 : index
    %c0_23 = arith.constant 0 : index
    %58 = vector.load %arg9[%c2, %c0_23] : memref<16x256xbf16, #tpu.memory_space<vmem>>, vector<2x128xbf16>
    %59 = arith.extf %58 : vector<2x128xbf16> to vector<2x128xf32>
    %60 = arith.addf %57, %59 : vector<2x128xf32>
    %61 = arith.truncf %51 : vector<2x32xf32> to vector<2x32xbf16>
    %cst_24 = arith.constant dense<0.000000e+00> : vector<2x128xf32>
    %62 = tpu.matmul %61, %10, %cst_24 {dimension_numbers = #tpu.dot_dimension_numbers<[1], [0], [0], [1], [0, 0, 1, 1], [], []>} : vector<2x32xbf16>, vector<32x128xbf16>, vector<2x128xf32> -> vector<2x128xf32>
    %c12 = arith.constant 12 : index
    %c128_25 = arith.constant 128 : index
    %63 = vector.load %arg9[%c12, %c128_25] : memref<16x256xbf16, #tpu.memory_space<vmem>>, vector<2x128xbf16>
    %64 = arith.extf %63 : vector<2x128xbf16> to vector<2x128xf32>
    %65 = arith.addf %62, %64 : vector<2x128xf32>
    %66 = arith.negf %60 : vector<2x128xf32>
    %67 = math.exp %66 : vector<2x128xf32>
    %cst_26 = arith.constant 1.000000e+00 : f32
    %68 = vector.broadcast %cst_26 : f32 to vector<2x128xf32>
    %69 = arith.addf %68, %67 : vector<2x128xf32>
    %70 = arith.divf %68, %69 : vector<2x128xf32>
    %71 = math.tanh %60 : vector<2x128xf32>
    %72 = vector.extract_strided_slice %70 {offsets = [0, 0], sizes = [2, 32], strides = [1, 1]} : vector<2x128xf32> to vector<2x32xf32>
    %73 = vector.extract_strided_slice %70 {offsets = [0, 32], sizes = [2, 32], strides = [1, 1]} : vector<2x128xf32> to vector<2x32xf32>
    %74 = vector.extract_strided_slice %71 {offsets = [0, 64], sizes = [2, 32], strides = [1, 1]} : vector<2x128xf32> to vector<2x32xf32>
    %75 = vector.extract_strided_slice %70 {offsets = [0, 96], sizes = [2, 32], strides = [1, 1]} : vector<2x128xf32> to vector<2x32xf32>
    %76 = arith.mulf %73, %34 : vector<2x32xf32>
    %77 = arith.mulf %72, %74 : vector<2x32xf32>
    %78 = arith.addf %76, %77 : vector<2x32xf32>
    %79 = math.tanh %78 : vector<2x32xf32>
    %80 = arith.mulf %75, %79 : vector<2x32xf32>
    %81 = arith.negf %65 : vector<2x128xf32>
    %82 = math.exp %81 : vector<2x128xf32>
    %cst_27 = arith.constant 1.000000e+00 : f32
    %83 = vector.broadcast %cst_27 : f32 to vector<2x128xf32>
    %84 = arith.addf %83, %82 : vector<2x128xf32>
    %85 = arith.divf %83, %84 : vector<2x128xf32>
    %86 = math.tanh %65 : vector<2x128xf32>
    %87 = vector.extract_strided_slice %85 {offsets = [0, 0], sizes = [2, 32], strides = [1, 1]} : vector<2x128xf32> to vector<2x32xf32>
    %88 = vector.extract_strided_slice %85 {offsets = [0, 32], sizes = [2, 32], strides = [1, 1]} : vector<2x128xf32> to vector<2x32xf32>
    %89 = vector.extract_strided_slice %86 {offsets = [0, 64], sizes = [2, 32], strides = [1, 1]} : vector<2x128xf32> to vector<2x32xf32>
    %90 = vector.extract_strided_slice %85 {offsets = [0, 96], sizes = [2, 32], strides = [1, 1]} : vector<2x128xf32> to vector<2x32xf32>
    %91 = arith.mulf %88, %49 : vector<2x32xf32>
    %92 = arith.mulf %87, %89 : vector<2x32xf32>
    %93 = arith.addf %91, %92 : vector<2x32xf32>
    %94 = math.tanh %93 : vector<2x32xf32>
    %95 = arith.mulf %90, %94 : vector<2x32xf32>
    %96 = arith.truncf %80 : vector<2x32xf32> to vector<2x32xbf16>
    %c2_28 = arith.constant 2 : index
    %c0_29 = arith.constant 0 : index
    %97 = vector.load %arg10[%c2_28, %c0_29] : memref<16x64xbf16, #tpu.memory_space<vmem>>, vector<2x32xbf16>
    tpu.vector_store %arg10[%c2_28, %c0_29], %96 {strides = array<i32>} : memref<16x64xbf16, #tpu.memory_space<vmem>>, vector<2x32xbf16>,
    %98 = arith.truncf %95 : vector<2x32xf32> to vector<2x32xbf16>
    %c12_30 = arith.constant 12 : index
    %c32_31 = arith.constant 32 : index
    %99 = vector.load %arg10[%c12_30, %c32_31] : memref<16x64xbf16, #tpu.memory_space<vmem>>, vector<2x32xbf16>
    tpu.vector_store %arg10[%c12_30, %c32_31], %98 {strides = array<i32>} : memref<16x64xbf16, #tpu.memory_space<vmem>>, vector<2x32xbf16>,
    %100 = arith.truncf %80 : vector<2x32xf32> to vector<2x32xbf16>
    %cst_32 = arith.constant dense<0.000000e+00> : vector<2x128xf32>
    %101 = tpu.matmul %100, %9, %cst_32 {dimension_numbers = #tpu.dot_dimension_numbers<[1], [0], [0], [1], [0, 0, 1, 1], [], []>} : vector<2x32xbf16>, vector<32x128xbf16>, vector<2x128xf32> -> vector<2x128xf32>
    %c4 = arith.constant 4 : index
    %c0_33 = arith.constant 0 : index
    %102 = vector.load %arg9[%c4, %c0_33] : memref<16x256xbf16, #tpu.memory_space<vmem>>, vector<2x128xbf16>
    %103 = arith.extf %102 : vector<2x128xbf16> to vector<2x128xf32>
    %104 = arith.addf %101, %103 : vector<2x128xf32>
    %105 = arith.truncf %95 : vector<2x32xf32> to vector<2x32xbf16>
    %cst_34 = arith.constant dense<0.000000e+00> : vector<2x128xf32>
    %106 = tpu.matmul %105, %10, %cst_34 {dimension_numbers = #tpu.dot_dimension_numbers<[1], [0], [0], [1], [0, 0, 1, 1], [], []>} : vector<2x32xbf16>, vector<32x128xbf16>, vector<2x128xf32> -> vector<2x128xf32>
    %c10 = arith.constant 10 : index
    %c128_35 = arith.constant 128 : index
    %107 = vector.load %arg9[%c10, %c128_35] : memref<16x256xbf16, #tpu.memory_space<vmem>>, vector<2x128xbf16>
    %108 = arith.extf %107 : vector<2x128xbf16> to vector<2x128xf32>
    %109 = arith.addf %106, %108 : vector<2x128xf32>
    %110 = arith.negf %104 : vector<2x128xf32>
    %111 = math.exp %110 : vector<2x128xf32>
    %cst_36 = arith.constant 1.000000e+00 : f32
    %112 = vector.broadcast %cst_36 : f32 to vector<2x128xf32>
    %113 = arith.addf %112, %111 : vector<2x128xf32>
    %114 = arith.divf %112, %113 : vector<2x128xf32>
    %115 = math.tanh %104 : vector<2x128xf32>
    %116 = vector.extract_strided_slice %114 {offsets = [0, 0], sizes = [2, 32], strides = [1, 1]} : vector<2x128xf32> to vector<2x32xf32>
    %117 = vector.extract_strided_slice %114 {offsets = [0, 32], sizes = [2, 32], strides = [1, 1]} : vector<2x128xf32> to vector<2x32xf32>
    %118 = vector.extract_strided_slice %115 {offsets = [0, 64], sizes = [2, 32], strides = [1, 1]} : vector<2x128xf32> to vector<2x32xf32>
    %119 = vector.extract_strided_slice %114 {offsets = [0, 96], sizes = [2, 32], strides = [1, 1]} : vector<2x128xf32> to vector<2x32xf32>
    %120 = arith.mulf %117, %78 : vector<2x32xf32>
    %121 = arith.mulf %116, %118 : vector<2x32xf32>
    %122 = arith.addf %120, %121 : vector<2x32xf32>
    %123 = math.tanh %122 : vector<2x32xf32>
    %124 = arith.mulf %119, %123 : vector<2x32xf32>
    %125 = arith.negf %109 : vector<2x128xf32>
    %126 = math.exp %125 : vector<2x128xf32>
    %cst_37 = arith.constant 1.000000e+00 : f32
    %127 = vector.broadcast %cst_37 : f32 to vector<2x128xf32>
    %128 = arith.addf %127, %126 : vector<2x128xf32>
    %129 = arith.divf %127, %128 : vector<2x128xf32>
    %130 = math.tanh %109 : vector<2x128xf32>
    %131 = vector.extract_strided_slice %129 {offsets = [0, 0], sizes = [2, 32], strides = [1, 1]} : vector<2x128xf32> to vector<2x32xf32>
    %132 = vector.extract_strided_slice %129 {offsets = [0, 32], sizes = [2, 32], strides = [1, 1]} : vector<2x128xf32> to vector<2x32xf32>
    %133 = vector.extract_strided_slice %130 {offsets = [0, 64], sizes = [2, 32], strides = [1, 1]} : vector<2x128xf32> to vector<2x32xf32>
    %134 = vector.extract_strided_slice %129 {offsets = [0, 96], sizes = [2, 32], strides = [1, 1]} : vector<2x128xf32> to vector<2x32xf32>
    %135 = arith.mulf %132, %93 : vector<2x32xf32>
    %136 = arith.mulf %131, %133 : vector<2x32xf32>
    %137 = arith.addf %135, %136 : vector<2x32xf32>
    %138 = math.tanh %137 : vector<2x32xf32>
    %139 = arith.mulf %134, %138 : vector<2x32xf32>
    %140 = arith.truncf %124 : vector<2x32xf32> to vector<2x32xbf16>
    %c4_38 = arith.constant 4 : index
    %c0_39 = arith.constant 0 : index
    %141 = vector.load %arg10[%c4_38, %c0_39] : memref<16x64xbf16, #tpu.memory_space<vmem>>, vector<2x32xbf16>
    tpu.vector_store %arg10[%c4_38, %c0_39], %140 {strides = array<i32>} : memref<16x64xbf16, #tpu.memory_space<vmem>>, vector<2x32xbf16>,
    %142 = arith.truncf %139 : vector<2x32xf32> to vector<2x32xbf16>
    %c10_40 = arith.constant 10 : index
    %c32_41 = arith.constant 32 : index
    %143 = vector.load %arg10[%c10_40, %c32_41] : memref<16x64xbf16, #tpu.memory_space<vmem>>, vector<2x32xbf16>
    tpu.vector_store %arg10[%c10_40, %c32_41], %142 {strides = array<i32>} : memref<16x64xbf16, #tpu.memory_space<vmem>>, vector<2x32xbf16>,
    %144 = arith.truncf %124 : vector<2x32xf32> to vector<2x32xbf16>
    %cst_42 = arith.constant dense<0.000000e+00> : vector<2x128xf32>
    %145 = tpu.matmul %144, %9, %cst_42 {dimension_numbers = #tpu.dot_dimension_numbers<[1], [0], [0], [1], [0, 0, 1, 1], [], []>} : vector<2x32xbf16>, vector<32x128xbf16>, vector<2x128xf32> -> vector<2x128xf32>
    %c6 = arith.constant 6 : index
    %c0_43 = arith.constant 0 : index
    %146 = vector.load %arg9[%c6, %c0_43] : memref<16x256xbf16, #tpu.memory_space<vmem>>, vector<2x128xbf16>
    %147 = arith.extf %146 : vector<2x128xbf16> to vector<2x128xf32>
    %148 = arith.addf %145, %147 : vector<2x128xf32>
    %149 = arith.truncf %139 : vector<2x32xf32> to vector<2x32xbf16>
    %cst_44 = arith.constant dense<0.000000e+00> : vector<2x128xf32>
    %150 = tpu.matmul %149, %10, %cst_44 {dimension_numbers = #tpu.dot_dimension_numbers<[1], [0], [0], [1], [0, 0, 1, 1], [], []>} : vector<2x32xbf16>, vector<32x128xbf16>, vector<2x128xf32> -> vector<2x128xf32>
    %c8 = arith.constant 8 : index
    %c128_45 = arith.constant 128 : index
    %151 = vector.load %arg9[%c8, %c128_45] : memref<16x256xbf16, #tpu.memory_space<vmem>>, vector<2x128xbf16>
    %152 = arith.extf %151 : vector<2x128xbf16> to vector<2x128xf32>
    %153 = arith.addf %150, %152 : vector<2x128xf32>
    %154 = arith.negf %148 : vector<2x128xf32>
    %155 = math.exp %154 : vector<2x128xf32>
    %cst_46 = arith.constant 1.000000e+00 : f32
    %156 = vector.broadcast %cst_46 : f32 to vector<2x128xf32>
    %157 = arith.addf %156, %155 : vector<2x128xf32>
    %158 = arith.divf %156, %157 : vector<2x128xf32>
    %159 = math.tanh %148 : vector<2x128xf32>
    %160 = vector.extract_strided_slice %158 {offsets = [0, 0], sizes = [2, 32], strides = [1, 1]} : vector<2x128xf32> to vector<2x32xf32>
    %161 = vector.extract_strided_slice %158 {offsets = [0, 32], sizes = [2, 32], strides = [1, 1]} : vector<2x128xf32> to vector<2x32xf32>
    %162 = vector.extract_strided_slice %159 {offsets = [0, 64], sizes = [2, 32], strides = [1, 1]} : vector<2x128xf32> to vector<2x32xf32>
    %163 = vector.extract_strided_slice %158 {offsets = [0, 96], sizes = [2, 32], strides = [1, 1]} : vector<2x128xf32> to vector<2x32xf32>
    %164 = arith.mulf %161, %122 : vector<2x32xf32>
    %165 = arith.mulf %160, %162 : vector<2x32xf32>
    %166 = arith.addf %164, %165 : vector<2x32xf32>
    %167 = math.tanh %166 : vector<2x32xf32>
    %168 = arith.mulf %163, %167 : vector<2x32xf32>
    %169 = arith.negf %153 : vector<2x128xf32>
    %170 = math.exp %169 : vector<2x128xf32>
    %cst_47 = arith.constant 1.000000e+00 : f32
    %171 = vector.broadcast %cst_47 : f32 to vector<2x128xf32>
    %172 = arith.addf %171, %170 : vector<2x128xf32>
    %173 = arith.divf %171, %172 : vector<2x128xf32>
    %174 = math.tanh %153 : vector<2x128xf32>
    %175 = vector.extract_strided_slice %173 {offsets = [0, 0], sizes = [2, 32], strides = [1, 1]} : vector<2x128xf32> to vector<2x32xf32>
    %176 = vector.extract_strided_slice %173 {offsets = [0, 32], sizes = [2, 32], strides = [1, 1]} : vector<2x128xf32> to vector<2x32xf32>
    %177 = vector.extract_strided_slice %174 {offsets = [0, 64], sizes = [2, 32], strides = [1, 1]} : vector<2x128xf32> to vector<2x32xf32>
    %178 = vector.extract_strided_slice %173 {offsets = [0, 96], sizes = [2, 32], strides = [1, 1]} : vector<2x128xf32> to vector<2x32xf32>
    %179 = arith.mulf %176, %137 : vector<2x32xf32>
    %180 = arith.mulf %175, %177 : vector<2x32xf32>
    %181 = arith.addf %179, %180 : vector<2x32xf32>
    %182 = math.tanh %181 : vector<2x32xf32>
    %183 = arith.mulf %178, %182 : vector<2x32xf32>
    %184 = arith.truncf %168 : vector<2x32xf32> to vector<2x32xbf16>
    %c6_48 = arith.constant 6 : index
    %c0_49 = arith.constant 0 : index
    %185 = vector.load %arg10[%c6_48, %c0_49] : memref<16x64xbf16, #tpu.memory_space<vmem>>, vector<2x32xbf16>
    tpu.vector_store %arg10[%c6_48, %c0_49], %184 {strides = array<i32>} : memref<16x64xbf16, #tpu.memory_space<vmem>>, vector<2x32xbf16>,
    %186 = arith.truncf %183 : vector<2x32xf32> to vector<2x32xbf16>
    %c8_50 = arith.constant 8 : index
    %c32_51 = arith.constant 32 : index
    %187 = vector.load %arg10[%c8_50, %c32_51] : memref<16x64xbf16, #tpu.memory_space<vmem>>, vector<2x32xbf16>
    tpu.vector_store %arg10[%c8_50, %c32_51], %186 {strides = array<i32>} : memref<16x64xbf16, #tpu.memory_space<vmem>>, vector<2x32xbf16>,
    %188 = arith.truncf %168 : vector<2x32xf32> to vector<2x32xbf16>
    %cst_52 = arith.constant dense<0.000000e+00> : vector<2x128xf32>
    %189 = tpu.matmul %188, %9, %cst_52 {dimension_numbers = #tpu.dot_dimension_numbers<[1], [0], [0], [1], [0, 0, 1, 1], [], []>} : vector<2x32xbf16>, vector<32x128xbf16>, vector<2x128xf32> -> vector<2x128xf32>
    %c8_53 = arith.constant 8 : index
    %c0_54 = arith.constant 0 : index
    %190 = vector.load %arg9[%c8_53, %c0_54] : memref<16x256xbf16, #tpu.memory_space<vmem>>, vector<2x128xbf16>
    %191 = arith.extf %190 : vector<2x128xbf16> to vector<2x128xf32>
    %192 = arith.addf %189, %191 : vector<2x128xf32>
    %193 = arith.truncf %183 : vector<2x32xf32> to vector<2x32xbf16>
    %cst_55 = arith.constant dense<0.000000e+00> : vector<2x128xf32>
    %194 = tpu.matmul %193, %10, %cst_55 {dimension_numbers = #tpu.dot_dimension_numbers<[1], [0], [0], [1], [0, 0, 1, 1], [], []>} : vector<2x32xbf16>, vector<32x128xbf16>, vector<2x128xf32> -> vector<2x128xf32>
    %c6_56 = arith.constant 6 : index
    %c128_57 = arith.constant 128 : index
    %195 = vector.load %arg9[%c6_56, %c128_57] : memref<16x256xbf16, #tpu.memory_space<vmem>>, vector<2x128xbf16>
    %196 = arith.extf %195 : vector<2x128xbf16> to vector<2x128xf32>
    %197 = arith.addf %194, %196 : vector<2x128xf32>
    %198 = arith.negf %192 : vector<2x128xf32>
    %199 = math.exp %198 : vector<2x128xf32>
    %cst_58 = arith.constant 1.000000e+00 : f32
    %200 = vector.broadcast %cst_58 : f32 to vector<2x128xf32>
    %201 = arith.addf %200, %199 : vector<2x128xf32>
    %202 = arith.divf %200, %201 : vector<2x128xf32>
    %203 = math.tanh %192 : vector<2x128xf32>
    %204 = vector.extract_strided_slice %202 {offsets = [0, 0], sizes = [2, 32], strides = [1, 1]} : vector<2x128xf32> to vector<2x32xf32>
    %205 = vector.extract_strided_slice %202 {offsets = [0, 32], sizes = [2, 32], strides = [1, 1]} : vector<2x128xf32> to vector<2x32xf32>
    %206 = vector.extract_strided_slice %203 {offsets = [0, 64], sizes = [2, 32], strides = [1, 1]} : vector<2x128xf32> to vector<2x32xf32>
    %207 = vector.extract_strided_slice %202 {offsets = [0, 96], sizes = [2, 32], strides = [1, 1]} : vector<2x128xf32> to vector<2x32xf32>
    %208 = arith.mulf %205, %166 : vector<2x32xf32>
    %209 = arith.mulf %204, %206 : vector<2x32xf32>
    %210 = arith.addf %208, %209 : vector<2x32xf32>
    %211 = math.tanh %210 : vector<2x32xf32>
    %212 = arith.mulf %207, %211 : vector<2x32xf32>
    %213 = arith.negf %197 : vector<2x128xf32>
    %214 = math.exp %213 : vector<2x128xf32>
    %cst_59 = arith.constant 1.000000e+00 : f32
    %215 = vector.broadcast %cst_59 : f32 to vector<2x128xf32>
    %216 = arith.addf %215, %214 : vector<2x128xf32>
    %217 = arith.divf %215, %216 : vector<2x128xf32>
    %218 = math.tanh %197 : vector<2x128xf32>
    %219 = vector.extract_strided_slice %217 {offsets = [0, 0], sizes = [2, 32], strides = [1, 1]} : vector<2x128xf32> to vector<2x32xf32>
    %220 = vector.extract_strided_slice %217 {offsets = [0, 32], sizes = [2, 32], strides = [1, 1]} : vector<2x128xf32> to vector<2x32xf32>
    %221 = vector.extract_strided_slice %218 {offsets = [0, 64], sizes = [2, 32], strides = [1, 1]} : vector<2x128xf32> to vector<2x32xf32>
    %222 = vector.extract_strided_slice %217 {offsets = [0, 96], sizes = [2, 32], strides = [1, 1]} : vector<2x128xf32> to vector<2x32xf32>
    %223 = arith.mulf %220, %181 : vector<2x32xf32>
    %224 = arith.mulf %219, %221 : vector<2x32xf32>
    %225 = arith.addf %223, %224 : vector<2x32xf32>
    %226 = math.tanh %225 : vector<2x32xf32>
    %227 = arith.mulf %222, %226 : vector<2x32xf32>
    %228 = arith.truncf %212 : vector<2x32xf32> to vector<2x32xbf16>
    %c8_60 = arith.constant 8 : index
    %c0_61 = arith.constant 0 : index
    %229 = vector.load %arg10[%c8_60, %c0_61] : memref<16x64xbf16, #tpu.memory_space<vmem>>, vector<2x32xbf16>
    tpu.vector_store %arg10[%c8_60, %c0_61], %228 {strides = array<i32>} : memref<16x64xbf16, #tpu.memory_space<vmem>>, vector<2x32xbf16>,
    %230 = arith.truncf %227 : vector<2x32xf32> to vector<2x32xbf16>
    %c6_62 = arith.constant 6 : index
    %c32_63 = arith.constant 32 : index
    %231 = vector.load %arg10[%c6_62, %c32_63] : memref<16x64xbf16, #tpu.memory_space<vmem>>, vector<2x32xbf16>
    tpu.vector_store %arg10[%c6_62, %c32_63], %230 {strides = array<i32>} : memref<16x64xbf16, #tpu.memory_space<vmem>>, vector<2x32xbf16>,
    %232 = arith.truncf %212 : vector<2x32xf32> to vector<2x32xbf16>
    %cst_64 = arith.constant dense<0.000000e+00> : vector<2x128xf32>
    %233 = tpu.matmul %232, %9, %cst_64 {dimension_numbers = #tpu.dot_dimension_numbers<[1], [0], [0], [1], [0, 0, 1, 1], [], []>} : vector<2x32xbf16>, vector<32x128xbf16>, vector<2x128xf32> -> vector<2x128xf32>
    %c10_65 = arith.constant 10 : index
    %c0_66 = arith.constant 0 : index
    %234 = vector.load %arg9[%c10_65, %c0_66] : memref<16x256xbf16, #tpu.memory_space<vmem>>, vector<2x128xbf16>
    %235 = arith.extf %234 : vector<2x128xbf16> to vector<2x128xf32>
    %236 = arith.addf %233, %235 : vector<2x128xf32>
    %237 = arith.truncf %227 : vector<2x32xf32> to vector<2x32xbf16>
    %cst_67 = arith.constant dense<0.000000e+00> : vector<2x128xf32>
    %238 = tpu.matmul %237, %10, %cst_67 {dimension_numbers = #tpu.dot_dimension_numbers<[1], [0], [0], [1], [0, 0, 1, 1], [], []>} : vector<2x32xbf16>, vector<32x128xbf16>, vector<2x128xf32> -> vector<2x128xf32>
    %c4_68 = arith.constant 4 : index
    %c128_69 = arith.constant 128 : index
    %239 = vector.load %arg9[%c4_68, %c128_69] : memref<16x256xbf16, #tpu.memory_space<vmem>>, vector<2x128xbf16>
    %240 = arith.extf %239 : vector<2x128xbf16> to vector<2x128xf32>
    %241 = arith.addf %238, %240 : vector<2x128xf32>
    %242 = arith.negf %236 : vector<2x128xf32>
    %243 = math.exp %242 : vector<2x128xf32>
    %cst_70 = arith.constant 1.000000e+00 : f32
    %244 = vector.broadcast %cst_70 : f32 to vector<2x128xf32>
    %245 = arith.addf %244, %243 : vector<2x128xf32>
    %246 = arith.divf %244, %245 : vector<2x128xf32>
    %247 = math.tanh %236 : vector<2x128xf32>
    %248 = vector.extract_strided_slice %246 {offsets = [0, 0], sizes = [2, 32], strides = [1, 1]} : vector<2x128xf32> to vector<2x32xf32>
    %249 = vector.extract_strided_slice %246 {offsets = [0, 32], sizes = [2, 32], strides = [1, 1]} : vector<2x128xf32> to vector<2x32xf32>
    %250 = vector.extract_strided_slice %247 {offsets = [0, 64], sizes = [2, 32], strides = [1, 1]} : vector<2x128xf32> to vector<2x32xf32>
    %251 = vector.extract_strided_slice %246 {offsets = [0, 96], sizes = [2, 32], strides = [1, 1]} : vector<2x128xf32> to vector<2x32xf32>
    %252 = arith.mulf %249, %210 : vector<2x32xf32>
    %253 = arith.mulf %248, %250 : vector<2x32xf32>
    %254 = arith.addf %252, %253 : vector<2x32xf32>
    %255 = math.tanh %254 : vector<2x32xf32>
    %256 = arith.mulf %251, %255 : vector<2x32xf32>
    %257 = arith.negf %241 : vector<2x128xf32>
    %258 = math.exp %257 : vector<2x128xf32>
    %cst_71 = arith.constant 1.000000e+00 : f32
    %259 = vector.broadcast %cst_71 : f32 to vector<2x128xf32>
    %260 = arith.addf %259, %258 : vector<2x128xf32>
    %261 = arith.divf %259, %260 : vector<2x128xf32>
    %262 = math.tanh %241 : vector<2x128xf32>
    %263 = vector.extract_strided_slice %261 {offsets = [0, 0], sizes = [2, 32], strides = [1, 1]} : vector<2x128xf32> to vector<2x32xf32>
    %264 = vector.extract_strided_slice %261 {offsets = [0, 32], sizes = [2, 32], strides = [1, 1]} : vector<2x128xf32> to vector<2x32xf32>
    %265 = vector.extract_strided_slice %262 {offsets = [0, 64], sizes = [2, 32], strides = [1, 1]} : vector<2x128xf32> to vector<2x32xf32>
    %266 = vector.extract_strided_slice %261 {offsets = [0, 96], sizes = [2, 32], strides = [1, 1]} : vector<2x128xf32> to vector<2x32xf32>
    %267 = arith.mulf %264, %225 : vector<2x32xf32>
    %268 = arith.mulf %263, %265 : vector<2x32xf32>
    %269 = arith.addf %267, %268 : vector<2x32xf32>
    %270 = math.tanh %269 : vector<2x32xf32>
    %271 = arith.mulf %266, %270 : vector<2x32xf32>
    %272 = arith.truncf %256 : vector<2x32xf32> to vector<2x32xbf16>
    %c10_72 = arith.constant 10 : index
    %c0_73 = arith.constant 0 : index
    %273 = vector.load %arg10[%c10_72, %c0_73] : memref<16x64xbf16, #tpu.memory_space<vmem>>, vector<2x32xbf16>
    tpu.vector_store %arg10[%c10_72, %c0_73], %272 {strides = array<i32>} : memref<16x64xbf16, #tpu.memory_space<vmem>>, vector<2x32xbf16>,
    %274 = arith.truncf %271 : vector<2x32xf32> to vector<2x32xbf16>
    %c4_74 = arith.constant 4 : index
    %c32_75 = arith.constant 32 : index
    %275 = vector.load %arg10[%c4_74, %c32_75] : memref<16x64xbf16, #tpu.memory_space<vmem>>, vector<2x32xbf16>
    tpu.vector_store %arg10[%c4_74, %c32_75], %274 {strides = array<i32>} : memref<16x64xbf16, #tpu.memory_space<vmem>>, vector<2x32xbf16>,
    %276 = arith.truncf %256 : vector<2x32xf32> to vector<2x32xbf16>
    %cst_76 = arith.constant dense<0.000000e+00> : vector<2x128xf32>
    %277 = tpu.matmul %276, %9, %cst_76 {dimension_numbers = #tpu.dot_dimension_numbers<[1], [0], [0], [1], [0, 0, 1, 1], [], []>} : vector<2x32xbf16>, vector<32x128xbf16>, vector<2x128xf32> -> vector<2x128xf32>
    %c12_77 = arith.constant 12 : index
    %c0_78 = arith.constant 0 : index
    %278 = vector.load %arg9[%c12_77, %c0_78] : memref<16x256xbf16, #tpu.memory_space<vmem>>, vector<2x128xbf16>
    %279 = arith.extf %278 : vector<2x128xbf16> to vector<2x128xf32>
    %280 = arith.addf %277, %279 : vector<2x128xf32>
    %281 = arith.truncf %271 : vector<2x32xf32> to vector<2x32xbf16>
    %cst_79 = arith.constant dense<0.000000e+00> : vector<2x128xf32>
    %282 = tpu.matmul %281, %10, %cst_79 {dimension_numbers = #tpu.dot_dimension_numbers<[1], [0], [0], [1], [0, 0, 1, 1], [], []>} : vector<2x32xbf16>, vector<32x128xbf16>, vector<2x128xf32> -> vector<2x128xf32>
    %c2_80 = arith.constant 2 : index
    %c128_81 = arith.constant 128 : index
    %283 = vector.load %arg9[%c2_80, %c128_81] : memref<16x256xbf16, #tpu.memory_space<vmem>>, vector<2x128xbf16>
    %284 = arith.extf %283 : vector<2x128xbf16> to vector<2x128xf32>
    %285 = arith.addf %282, %284 : vector<2x128xf32>
    %286 = arith.negf %280 : vector<2x128xf32>
    %287 = math.exp %286 : vector<2x128xf32>
    %cst_82 = arith.constant 1.000000e+00 : f32
    %288 = vector.broadcast %cst_82 : f32 to vector<2x128xf32>
    %289 = arith.addf %288, %287 : vector<2x128xf32>
    %290 = arith.divf %288, %289 : vector<2x128xf32>
    %291 = math.tanh %280 : vector<2x128xf32>
    %292 = vector.extract_strided_slice %290 {offsets = [0, 0], sizes = [2, 32], strides = [1, 1]} : vector<2x128xf32> to vector<2x32xf32>
    %293 = vector.extract_strided_slice %290 {offsets = [0, 32], sizes = [2, 32], strides = [1, 1]} : vector<2x128xf32> to vector<2x32xf32>
    %294 = vector.extract_strided_slice %291 {offsets = [0, 64], sizes = [2, 32], strides = [1, 1]} : vector<2x128xf32> to vector<2x32xf32>
    %295 = vector.extract_strided_slice %290 {offsets = [0, 96], sizes = [2, 32], strides = [1, 1]} : vector<2x128xf32> to vector<2x32xf32>
    %296 = arith.mulf %293, %254 : vector<2x32xf32>
    %297 = arith.mulf %292, %294 : vector<2x32xf32>
    %298 = arith.addf %296, %297 : vector<2x32xf32>
    %299 = math.tanh %298 : vector<2x32xf32>
    %300 = arith.mulf %295, %299 : vector<2x32xf32>
    %301 = arith.negf %285 : vector<2x128xf32>
    %302 = math.exp %301 : vector<2x128xf32>
    %cst_83 = arith.constant 1.000000e+00 : f32
    %303 = vector.broadcast %cst_83 : f32 to vector<2x128xf32>
    %304 = arith.addf %303, %302 : vector<2x128xf32>
    %305 = arith.divf %303, %304 : vector<2x128xf32>
    %306 = math.tanh %285 : vector<2x128xf32>
    %307 = vector.extract_strided_slice %305 {offsets = [0, 0], sizes = [2, 32], strides = [1, 1]} : vector<2x128xf32> to vector<2x32xf32>
    %308 = vector.extract_strided_slice %305 {offsets = [0, 32], sizes = [2, 32], strides = [1, 1]} : vector<2x128xf32> to vector<2x32xf32>
    %309 = vector.extract_strided_slice %306 {offsets = [0, 64], sizes = [2, 32], strides = [1, 1]} : vector<2x128xf32> to vector<2x32xf32>
    %310 = vector.extract_strided_slice %305 {offsets = [0, 96], sizes = [2, 32], strides = [1, 1]} : vector<2x128xf32> to vector<2x32xf32>
    %311 = arith.mulf %308, %269 : vector<2x32xf32>
    %312 = arith.mulf %307, %309 : vector<2x32xf32>
    %313 = arith.addf %311, %312 : vector<2x32xf32>
    %314 = math.tanh %313 : vector<2x32xf32>
    %315 = arith.mulf %310, %314 : vector<2x32xf32>
    %316 = arith.truncf %300 : vector<2x32xf32> to vector<2x32xbf16>
    %c12_84 = arith.constant 12 : index
    %c0_85 = arith.constant 0 : index
    %317 = vector.load %arg10[%c12_84, %c0_85] : memref<16x64xbf16, #tpu.memory_space<vmem>>, vector<2x32xbf16>
    tpu.vector_store %arg10[%c12_84, %c0_85], %316 {strides = array<i32>} : memref<16x64xbf16, #tpu.memory_space<vmem>>, vector<2x32xbf16>,
    %318 = arith.truncf %315 : vector<2x32xf32> to vector<2x32xbf16>
    %c2_86 = arith.constant 2 : index
    %c32_87 = arith.constant 32 : index
    %319 = vector.load %arg10[%c2_86, %c32_87] : memref<16x64xbf16, #tpu.memory_space<vmem>>, vector<2x32xbf16>
    tpu.vector_store %arg10[%c2_86, %c32_87], %318 {strides = array<i32>} : memref<16x64xbf16, #tpu.memory_space<vmem>>, vector<2x32xbf16>,
    %320 = arith.truncf %300 : vector<2x32xf32> to vector<2x32xbf16>
    %cst_88 = arith.constant dense<0.000000e+00> : vector<2x128xf32>
    %321 = tpu.matmul %320, %9, %cst_88 {dimension_numbers = #tpu.dot_dimension_numbers<[1], [0], [0], [1], [0, 0, 1, 1], [], []>} : vector<2x32xbf16>, vector<32x128xbf16>, vector<2x128xf32> -> vector<2x128xf32>
    %c14_89 = arith.constant 14 : index
    %c0_90 = arith.constant 0 : index
    %322 = vector.load %arg9[%c14_89, %c0_90] : memref<16x256xbf16, #tpu.memory_space<vmem>>, vector<2x128xbf16>
    %323 = arith.extf %322 : vector<2x128xbf16> to vector<2x128xf32>
    %324 = arith.addf %321, %323 : vector<2x128xf32>
    %325 = arith.truncf %315 : vector<2x32xf32> to vector<2x32xbf16>
    %cst_91 = arith.constant dense<0.000000e+00> : vector<2x128xf32>
    %326 = tpu.matmul %325, %10, %cst_91 {dimension_numbers = #tpu.dot_dimension_numbers<[1], [0], [0], [1], [0, 0, 1, 1], [], []>} : vector<2x32xbf16>, vector<32x128xbf16>, vector<2x128xf32> -> vector<2x128xf32>
    %c0_92 = arith.constant 0 : index
    %c128_93 = arith.constant 128 : index
    %327 = vector.load %arg9[%c0_92, %c128_93] : memref<16x256xbf16, #tpu.memory_space<vmem>>, vector<2x128xbf16>
    %328 = arith.extf %327 : vector<2x128xbf16> to vector<2x128xf32>
    %329 = arith.addf %326, %328 : vector<2x128xf32>
    %330 = arith.negf %324 : vector<2x128xf32>
    %331 = math.exp %330 : vector<2x128xf32>
    %cst_94 = arith.constant 1.000000e+00 : f32
    %332 = vector.broadcast %cst_94 : f32 to vector<2x128xf32>
    %333 = arith.addf %332, %331 : vector<2x128xf32>
    %334 = arith.divf %332, %333 : vector<2x128xf32>
    %335 = math.tanh %324 : vector<2x128xf32>
    %336 = vector.extract_strided_slice %334 {offsets = [0, 0], sizes = [2, 32], strides = [1, 1]} : vector<2x128xf32> to vector<2x32xf32>
    %337 = vector.extract_strided_slice %334 {offsets = [0, 32], sizes = [2, 32], strides = [1, 1]} : vector<2x128xf32> to vector<2x32xf32>
    %338 = vector.extract_strided_slice %335 {offsets = [0, 64], sizes = [2, 32], strides = [1, 1]} : vector<2x128xf32> to vector<2x32xf32>
    %339 = vector.extract_strided_slice %334 {offsets = [0, 96], sizes = [2, 32], strides = [1, 1]} : vector<2x128xf32> to vector<2x32xf32>
    %340 = arith.mulf %337, %298 : vector<2x32xf32>
    %341 = arith.mulf %336, %338 : vector<2x32xf32>
    %342 = arith.addf %340, %341 : vector<2x32xf32>
    %343 = math.tanh %342 : vector<2x32xf32>
    %344 = arith.mulf %339, %343 : vector<2x32xf32>
    %345 = arith.negf %329 : vector<2x128xf32>
    %346 = math.exp %345 : vector<2x128xf32>
    %cst_95 = arith.constant 1.000000e+00 : f32
    %347 = vector.broadcast %cst_95 : f32 to vector<2x128xf32>
    %348 = arith.addf %347, %346 : vector<2x128xf32>
    %349 = arith.divf %347, %348 : vector<2x128xf32>
    %350 = math.tanh %329 : vector<2x128xf32>
    %351 = vector.extract_strided_slice %349 {offsets = [0, 0], sizes = [2, 32], strides = [1, 1]} : vector<2x128xf32> to vector<2x32xf32>
    %352 = vector.extract_strided_slice %349 {offsets = [0, 32], sizes = [2, 32], strides = [1, 1]} : vector<2x128xf32> to vector<2x32xf32>
    %353 = vector.extract_strided_slice %350 {offsets = [0, 64], sizes = [2, 32], strides = [1, 1]} : vector<2x128xf32> to vector<2x32xf32>
    %354 = vector.extract_strided_slice %349 {offsets = [0, 96], sizes = [2, 32], strides = [1, 1]} : vector<2x128xf32> to vector<2x32xf32>
    %355 = arith.mulf %352, %313 : vector<2x32xf32>
    %356 = arith.mulf %351, %353 : vector<2x32xf32>
    %357 = arith.addf %355, %356 : vector<2x32xf32>
    %358 = math.tanh %357 : vector<2x32xf32>
    %359 = arith.mulf %354, %358 : vector<2x32xf32>
    %360 = arith.truncf %344 : vector<2x32xf32> to vector<2x32xbf16>
    %c14_96 = arith.constant 14 : index
    %c0_97 = arith.constant 0 : index
    %361 = vector.load %arg10[%c14_96, %c0_97] : memref<16x64xbf16, #tpu.memory_space<vmem>>, vector<2x32xbf16>
    tpu.vector_store %arg10[%c14_96, %c0_97], %360 {strides = array<i32>} : memref<16x64xbf16, #tpu.memory_space<vmem>>, vector<2x32xbf16>,
    %362 = arith.truncf %359 : vector<2x32xf32> to vector<2x32xbf16>
    %c0_98 = arith.constant 0 : index
    %c32_99 = arith.constant 32 : index
    %363 = vector.load %arg10[%c0_98, %c32_99] : memref<16x64xbf16, #tpu.memory_space<vmem>>, vector<2x32xbf16>
    tpu.vector_store %arg10[%c0_98, %c32_99], %362 {strides = array<i32>} : memref<16x64xbf16, #tpu.memory_space<vmem>>, vector<2x32xbf16>,
    %c0_100 = arith.constant 0 : index
    %c0_101 = arith.constant 0 : index
    %364 = vector.load %arg10[%c0_100, %c0_101] : memref<16x64xbf16, #tpu.memory_space<vmem>>, vector<16x64xbf16>
    %c0_102 = arith.constant 0 : index
    %c0_103 = arith.constant 0 : index
    %365 = vector.load %arg6[%c0_102, %c0_103] : memref<64x128xbf16, #tpu.memory_space<vmem>>, vector<64x128xbf16>
    %cst_104 = arith.constant dense<0.000000e+00> : vector<16x128xf32>
    %366 = tpu.matmul %364, %365, %cst_104 {dimension_numbers = #tpu.dot_dimension_numbers<[1], [0], [0], [1], [0, 0, 1, 1], [], []>} : vector<16x64xbf16>, vector<64x128xbf16>, vector<16x128xf32> -> vector<16x128xf32>
    %c0_105 = arith.constant 0 : index
    %c0_106 = arith.constant 0 : index
    %367 = vector.load %arg7[%c0_105, %c0_106] : memref<1x128xf32, #tpu.memory_space<vmem>>, vector<1x128xf32>
    %368 = vector.broadcast %367 : vector<1x128xf32> to vector<16x128xf32>
    %369 = arith.addf %366, %368 : vector<16x128xf32>
    %c0_107 = arith.constant 0 : index
    %c0_108 = arith.constant 0 : index
    %c0_109 = arith.constant 0 : index
    %370 = vector.load %arg8[%c0_107, %c0_108, %c0_109] : memref<1x16x128xf32, #tpu.memory_space<vmem>>, vector<1x16x128xf32>
    %371 = vector.shape_cast %370 : vector<1x16x128xf32> to vector<16x128xf32>
    %372 = vector.shape_cast %369 : vector<16x128xf32> to vector<1x16x128xf32>
    tpu.vector_store %arg8[%c0_107, %c0_108, %c0_109], %372 {strides = array<i32>} : memref<1x16x128xf32, #tpu.memory_space<vmem>>, vector<1x16x128xf32>,
    return
  }
  func.func @transform_0(%arg0: i32) -> (i32, i32, i32) {
    %c0_i32 = arith.constant 0 : i32
    %c0_i32_0 = arith.constant 0 : i32
    %c0_i32_1 = arith.constant 0 : i32
    return %arg0, %c0_i32, %c0_i32_0 : i32, i32, i32
  }
  func.func @transform_1(%arg0: i32) -> (i32, i32) {
    %c0_i32 = arith.constant 0 : i32
    %c0_i32_0 = arith.constant 0 : i32
    %c0_i32_1 = arith.constant 0 : i32
    return %c0_i32, %c0_i32_0 : i32, i32
  }
  func.func @transform_2(%arg0: i32) -> (i32, i32) {
    %c0_i32 = arith.constant 0 : i32
    %c0_i32_0 = arith.constant 0 : i32
    %c0_i32_1 = arith.constant 0 : i32
    return %c0_i32, %c0_i32_0 : i32, i32
  }
  func.func @transform_3(%arg0: i32) -> (i32, i32) {
    %c0_i32 = arith.constant 0 : i32
    %c0_i32_0 = arith.constant 0 : i32
    %c0_i32_1 = arith.constant 0 : i32
    return %c0_i32, %c0_i32_0 : i32, i32
  }
  func.func @transform_4(%arg0: i32) -> (i32, i32) {
    %c0_i32 = arith.constant 0 : i32
    %c0_i32_0 = arith.constant 0 : i32
    %c0_i32_1 = arith.constant 0 : i32
    return %c0_i32, %c0_i32_0 : i32, i32
  }
  func.func @transform_5(%arg0: i32) -> (i32, i32) {
    %c0_i32 = arith.constant 0 : i32
    %c0_i32_0 = arith.constant 0 : i32
    %c0_i32_1 = arith.constant 0 : i32
    return %c0_i32, %c0_i32_0 : i32, i32
  }
  func.func @transform_6(%arg0: i32) -> (i32, i32) {
    %c0_i32 = arith.constant 0 : i32
    %c0_i32_0 = arith.constant 0 : i32
    %c0_i32_1 = arith.constant 0 : i32
    return %c0_i32, %c0_i32_0 : i32, i32
  }
  func.func @transform_7(%arg0: i32) -> (i32, i32, i32) {
    %c0_i32 = arith.constant 0 : i32
    %c0_i32_0 = arith.constant 0 : i32
    %c0_i32_1 = arith.constant 0 : i32
    return %arg0, %c0_i32, %c0_i32_0 : i32, i32, i32
  }
}

</mosaic_0001>

<llo_original>
// kernel: tpu_custom_call.1
$region0: #{tpu_custom_call.1}
  #allocation0 [shape = 'u32[]', space=smem, size = 0x4, offset = 0x4, fixed_abs, tag = 'smem constant byte address 0x4 - core index']
  #allocation1 [shape = 'u32[144,128]{1,0:T(1,128)}', space=vmem, size = 0x12000, scoped, tag = 'internal scratch']
  #allocation2 [shape = 'bf16[16,256]{1,0:T(8,128)(2,1)}', space=vmem, size = 0x2000, scoped, tag = 'scratch operand']
  #allocation3 [shape = 'bf16[16,64]{1,0:T(8,128)(2,1)}', space=vmem, size = 0x1000, scoped, tag = 'scratch operand']
  %s0 = inlined_call_operand.hbm [shape: bf16[1,16,32], index: 0, kind: input, shape index: {}]
  %s1 = inlined_call_operand.hbm [shape: bf16[32,256], index: 1, kind: input, shape index: {}]
  %s2 = inlined_call_operand.vmem [shape: f32[1,256], index: 2, kind: input, shape index: {}]
  %s3 = inlined_call_operand.hbm [shape: bf16[32,128], index: 3, kind: input, shape index: {}]
  %s4 = inlined_call_operand.hbm [shape: bf16[32,128], index: 4, kind: input, shape index: {}]
  %s5 = inlined_call_operand.hbm [shape: bf16[64,128], index: 5, kind: input, shape index: {}]
  %s6 = inlined_call_operand.vmem [shape: f32[1,128], index: 6, kind: input, shape index: {}]
  %s7 = inlined_call_operand.hbm [shape: f32[1,16,128], index: 7, kind: output, shape index: {}]
  %s8 = sld [smem:[#allocation0]]
  $region58: #{tpu_custom_call.1} parent=0
    _
  %s10 = ssub.s32 1, %s8
  %s11 = scalar_select 0, %s10, %s8
  $region1: #{tpu_custom_call.1} parent=0
    #allocation4 [shape = 'u8[4096]{0}', space=vmem, size = 0x1000, scoped, tag = 'input window, operand 0, single buffered']
    #allocation5 [shape = 's32[1]{0}', space=sflag, size = 0x4, scoped, tag = 'scoped memory for tpu_custom_call.1']
    #allocation6 [shape = 's32[1]{0}', space=sflag, size = 0x4, scoped, tag = 'scoped memory for tpu_custom_call.1']
    #allocation7 [shape = 'u8[16384]{0}', space=vmem, size = 0x4000, scoped, tag = 'input window, operand 1, single buffered']
    #allocation8 [shape = 's32[1]{0}', space=sflag, size = 0x4, scoped, tag = 'scoped memory for tpu_custom_call.1']
    #allocation9 [shape = 'u8[8192]{0}', space=vmem, size = 0x2000, scoped, tag = 'input window, operand 3, single buffered']
    #allocation10 [shape = 'u8[8192]{0}', space=vmem, size = 0x2000, scoped, tag = 'input window, operand 4, single buffered']
    #allocation11 [shape = 's32[1]{0}', space=sflag, size = 0x4, scoped, tag = 'scoped memory for tpu_custom_call.1']
    #allocation12 [shape = 'u8[16384]{0}', space=vmem, size = 0x4000, scoped, tag = 'input window, operand 5, single buffered']
    #allocation13 [shape = 'u8[8192]{0}', space=vmem, size = 0x2000, scoped, tag = 'output window, operand 0, single buffered']
    %12 = vsyncpa [#allocation5], 0
    %13 = vsyncpa [#allocation8], 0
    %14 = vsyncpa [#allocation11], 0
    %15 = vsyncpa [#allocation6], 0
    // Predicated region
    $region2: #{tpu_custom_call.1} parent=1 // pred_check
      _
    $region3: #{tpu_custom_call.1} parent=1 // pred_check_branch
      %17 = sbr.rel (0) target = $region5
    $region4: #{tpu_custom_call.1} parent=1 // pred_region
      %s19 = ssub.s32 128, 128
      %20 = vsyncadd [#allocation5], %s19
      %s21 = sshll.u32 [#allocation4], 4
      %s22 = int_to_ptr.vmem [resolvable:$true] %s21
      %27 = dma.hbm_to_vmem [thread:$0]  %s0, 128, %s22, [#allocation5], 64, 64, 4
    $region5: #{tpu_custom_call.1} parent=1 // pred_fallthru
      _
    // Predicated region
    $region6: #{tpu_custom_call.1} parent=1 // pred_check
      _
    $region7: #{tpu_custom_call.1} parent=1 // pred_check_branch
      %29 = sbr.rel (0) target = $region9
    $region8: #{tpu_custom_call.1} parent=1 // pred_region
      %s31 = ssub.s32 512, 512
      %32 = vsyncadd [#allocation8], %s31
      %s33 = sshll.u32 [#allocation7], 4
      %s34 = int_to_ptr.vmem [resolvable:$true] %s33
      %39 = dma.hbm_to_vmem [thread:$0]  %s1, 512, %s34, [#allocation8], 128, 128, 8
    $region9: #{tpu_custom_call.1} parent=1 // pred_fallthru
      _
    // Predicated region
    $region10: #{tpu_custom_call.1} parent=1 // pred_check
      _
    $region11: #{tpu_custom_call.1} parent=1 // pred_check_branch
      %41 = sbr.rel (0) target = $region13
    $region12: #{tpu_custom_call.1} parent=1 // pred_region
      _
    $region13: #{tpu_custom_call.1} parent=1 // pred_fallthru
      _
    // Predicated region
    $region14: #{tpu_custom_call.1} parent=1 // pred_check
      _
    $region15: #{tpu_custom_call.1} parent=1 // pred_check_branch
      %43 = sbr.rel (0) target = $region17
    $region16: #{tpu_custom_call.1} parent=1 // pred_region
      %s45 = ssub.s32 256, 256
      %46 = vsyncadd [#allocation8], %s45
      %s47 = sshll.u32 [#allocation9], 4
      %s48 = int_to_ptr.vmem [resolvable:$true] %s47
      %53 = dma.hbm_to_vmem [thread:$0]  %s3, 256, %s48, [#allocation8], 64, 64, 4
    $region17: #{tpu_custom_call.1} parent=1 // pred_fallthru
      _
    // Predicated region
    $region18: #{tpu_custom_call.1} parent=1 // pred_check
      _
    $region19: #{tpu_custom_call.1} parent=1 // pred_check_branch
      %55 = sbr.rel (0) target = $region21
    $region20: #{tpu_custom_call.1} parent=1 // pred_region
      %s57 = ssub.s32 256, 256
      %58 = vsyncadd [#allocation11], %s57
      %s59 = sshll.u32 [#allocation10], 4
      %s60 = int_to_ptr.vmem [resolvable:$true] %s59
      %65 = dma.hbm_to_vmem [thread:$0]  %s4, 256, %s60, [#allocation11], 64, 64, 4
    $region21: #{tpu_custom_call.1} parent=1 // pred_fallthru
      _
    // Predicated region
    $region22: #{tpu_custom_call.1} parent=1 // pred_check
      _
    $region23: #{tpu_custom_call.1} parent=1 // pred_check_branch
      %67 = sbr.rel (0) target = $region25
    $region24: #{tpu_custom_call.1} parent=1 // pred_region
      %s69 = ssub.s32 512, 512
      %70 = vsyncadd [#allocation11], %s69
      %s71 = sshll.u32 [#allocation12], 4
      %s72 = int_to_ptr.vmem [resolvable:$true] %s71
      %77 = dma.hbm_to_vmem [thread:$0]  %s5, 512, %s72, [#allocation11], 64, 64, 4
    $region25: #{tpu_custom_call.1} parent=1 // pred_fallthru
      _
    // Predicated region
    $region26: #{tpu_custom_call.1} parent=1 // pred_check
      _
    $region27: #{tpu_custom_call.1} parent=1 // pred_check_branch
      %79 = sbr.rel (0) target = $region29
    $region28: #{tpu_custom_call.1} parent=1 // pred_region
      _
    $region29: #{tpu_custom_call.1} parent=1 // pred_fallthru
      _
    // Predicated region
    $region30: #{tpu_custom_call.1} parent=1 // pred_check
      _
    $region31: #{tpu_custom_call.1} parent=1 // pred_check_branch
      %81 = sbr.rel (0) target = $region33
    $region32: #{tpu_custom_call.1} parent=1 // pred_region
      %82 = dma.done [#allocation5], 128
    $region33: #{tpu_custom_call.1} parent=1 // pred_fallthru
      _
    // Predicated region
    $region34: #{tpu_custom_call.1} parent=1 // pred_check
      _
    $region35: #{tpu_custom_call.1} parent=1 // pred_check_branch
      %84 = sbr.rel (0) target = $region37
    $region36: #{tpu_custom_call.1} parent=1 // pred_region
      %85 = dma.done [#allocation8], 512
    $region37: #{tpu_custom_call.1} parent=1 // pred_fallthru
      _
    // Predicated region
    $region38: #{tpu_custom_call.1} parent=1 // pred_check
      _
    $region39: #{tpu_custom_call.1} parent=1 // pred_check_branch
      %87 = sbr.rel (0) target = $region41
    $region40: #{tpu_custom_call.1} parent=1 // pred_region
      %88 = dma.done [#allocation8], 256
    $region41: #{tpu_custom_call.1} parent=1 // pred_fallthru
      _
    // Predicated region
    $region42: #{tpu_custom_call.1} parent=1 // pred_check
      _
    $region43: #{tpu_custom_call.1} parent=1 // pred_check_branch
      %90 = sbr.rel (0) target = $region45
    $region44: #{tpu_custom_call.1} parent=1 // pred_region
      %91 = dma.done [#allocation11], 256
    $region45: #{tpu_custom_call.1} parent=1 // pred_fallthru
      _
    // Predicated region
    $region46: #{tpu_custom_call.1} parent=1 // pred_check
      _
    $region47: #{tpu_custom_call.1} parent=1 // pred_check_branch
      %93 = sbr.rel (0) target = $region49
    $region48: #{tpu_custom_call.1} parent=1 // pred_region
      %94 = dma.done [#allocation11], 512
    $region49: #{tpu_custom_call.1} parent=1 // pred_fallthru
      _
    %v96 = vld [vmem:[#allocation4] sm:$0xf]
    %v97 = vld [vmem:[#allocation4 + $0x4] sm:$0xf]
    %v98 = vld [vmem:[#allocation7] sm:$0xff]
    %v99 = vld [vmem:[#allocation7 + $0x8] sm:$0xff]
    %v100 = vld [vmem:[#allocation7 + $0x10] sm:$0xff]
    %v101 = vld [vmem:[#allocation7 + $0x18] sm:$0xff]
    %v102 = vld [vmem:[%s2] sm:$0x3]
    %v104 = vlaneseq
    %v105 = vshrl.u32 %v104, 7
    %v106 = vsub.s32 0, %v105
    %v107 = vrot.slane %v102, %v106
    %v108 = vlaneseq
    %v109 = vshrl.u32 %v108, 7
    %v110 = vsub.s32 1, %v109
    %v111 = vrot.slane %v102, %v110
    %v116 = vunpack.c.l.b16 %v96
    %v117 = vunpack.c.l.b16 %v97
    %v118 = vpack.c.b16 %v117, %v116
    %v123 = vunpack.c.l.b16 %v98
    %v124 = vunpack.c.h.b16 %v98
    %v125 = vunpack.c.l.b16 %v99
    %v126 = vunpack.c.h.b16 %v99
    %v127 = vunpack.c.l.b16 %v100
    %v128 = vunpack.c.h.b16 %v100
    %v129 = vunpack.c.l.b16 %v101
    %v130 = vunpack.c.h.b16 %v101
    %v131 = vpack.c.b16 %v125, %v123
    %v132 = vpack.c.b16 %v126, %v124
    %v133 = vpack.c.b16 %v129, %v127
    %v134 = vpack.c.b16 %v130, %v128
    %vm139 = vcmask 261120
    %v141 = vsel %vm139, %v118, 0
    %143 = vmatprep.subr.bf16.mxu0 0
    %144 = vmatpush1.bf16.msra.mxu0 0
    %145 = vmatprep.subr.bf16.mxu0 0
    %146 = vmatpush1.bf16.msra.mxu0 0
    %147 = vmatprep.subr.bf16.mxu0 0
    %148 = vmatpush1.bf16.msra.mxu0 0
    %149 = vmatprep.subr.bf16.mxu0 0
    %150 = vmatpush1.bf16.msra.mxu0 0
    %151 = vmatprep.subr.bf16.mxu0 0
    %152 = vmatpush1.bf16.msra.mxu0 0
    %153 = vmatprep.subr.bf16.mxu0 0
    %154 = vmatpush1.bf16.msra.mxu0 0
    %155 = vmatprep.subr.bf16.mxu0 %v134
    %156 = vmatpush1.bf16.msra.mxu0 %v133
    %157 = vmatprep.subr.bf16.mxu0 %v132
    %158 = vmatpush1.bf16.msra.mxu0 %v131
    %159 = vmatprep.subr.bf16.mxu0 0
    %160 = vmatpush2.bf16.msra.mxu0 0
    %161 = vmatprep.subr.bf16.mxu0 0
    %162 = vmatpush2.bf16.msra.mxu0 0
    %163 = vmatprep.subr.bf16.mxu0 0
    %164 = vmatpush2.bf16.msra.mxu0 0
    %165 = vmatprep.subr.bf16.mxu0 0
    %166 = vmatpush2.bf16.msra.mxu0 0
    %167 = vmatprep.subr.bf16.mxu0 0
    %168 = vmatpush2.bf16.msra.mxu0 0
    %169 = vmatprep.subr.bf16.mxu0 0
    %170 = vmatpush2.bf16.msra.mxu0 0
    %171 = vmatprep.subr.bf16.mxu0 0
    %172 = vmatpush2.bf16.msra.mxu0 0
    %173 = vmatprep.subr.bf16.mxu0 0
    %174 = vmatpush2.bf16.msra.mxu0 0
    %175 = vmatprep.mubr.bf16.mxu0 0
    %176 = vmatmul.mubr.bf16.gmra.mxu0 %v141
    %v177 = vpop.f32.mrf.mxu0
    %v178 = vadd.f32 %v107, %v177
    %v179 = vpop.f32.mrf.mxu0
    %v180 = vadd.f32 %v111, %v179
    %v181 = vpop.f32.mrf.mxu0
    %v182 = vadd.f32 %v107, %v181
    %v183 = vpop.f32.mrf.mxu0
    %v184 = vadd.f32 %v111, %v183
    %185 = vdwg.mxu0
    %v186 = vpack.c.bf16 %v182, %v178
    %v187 = vpack.c.bf16 %v184, %v180
    %v190 = vunpack.c.l.b16 %v186
    %v191 = vunpack.c.l.b16 %v187
    %v192 = vunpack.c.h.b16 %v186
    %v193 = vunpack.c.h.b16 %v187
    %v194 = vpack.c.b16 %v191, %v190
    %v195 = vpack.c.b16 %v193, %v192
    %198 = vst [vmem:[#allocation2] sm:$0xff] %v194
    %199 = vst [vmem:[#allocation2 + $0x8] sm:$0xff] %v195
    %v200 = vld [vmem:[#allocation9] sm:$0xf]
    %v201 = vld [vmem:[#allocation9 + $0x4] sm:$0xf]
    %v202 = vld [vmem:[#allocation9 + $0x8] sm:$0xf]
    %v203 = vld [vmem:[#allocation9 + $0xc] sm:$0xf]
    %v204 = vld [vmem:[#allocation10] sm:$0xf]
    %v205 = vld [vmem:[#allocation10 + $0x4] sm:$0xf]
    %v206 = vld [vmem:[#allocation10 + $0x8] sm:$0xf]
    %v207 = vld [vmem:[#allocation10 + $0xc] sm:$0xf]
    %v208 = vld [vmem:[#allocation2] sm:$0x1]
    %v209 = vunpack.c.l.bf16 %v208
    %v214 = vunpack.c.l.b16 %v200
    %v215 = vunpack.c.l.b16 %v201
    %v216 = vunpack.c.l.b16 %v202
    %v217 = vunpack.c.l.b16 %v203
    %v218 = vpack.c.b16 %v215, %v214
    %v219 = vpack.c.b16 %v217, %v216
    %v223 = vsel %vm139, 0, 0
    %225 = vmatprep.subr.bf16.mxu0 0
    %226 = vmatpush1.bf16.msra.mxu0 0
    %227 = vmatprep.subr.bf16.mxu0 0
    %228 = vmatpush1.bf16.msra.mxu0 0
    %229 = vmatprep.subr.bf16.mxu0 0
    %230 = vmatpush1.bf16.msra.mxu0 0
    %231 = vmatprep.subr.bf16.mxu0 0
    %232 = vmatpush1.bf16.msra.mxu0 0
    %233 = vmatprep.subr.bf16.mxu0 0
    %234 = vmatpush1.bf16.msra.mxu0 0
    %235 = vmatprep.subr.bf16.mxu0 0
    %236 = vmatpush1.bf16.msra.mxu0 0
    %237 = vmatprep.subr.bf16.mxu0 0
    %238 = vmatpush1.bf16.msra.mxu0 %v219
    %239 = vmatprep.subr.bf16.mxu0 0
    %240 = vmatpush1.bf16.msra.mxu0 %v218
    %241 = vmatprep.subr.bf16.mxu0 0
    %242 = vmatpush2.bf16.msra.mxu0 0
    %243 = vmatprep.subr.bf16.mxu0 0
    %244 = vmatpush2.bf16.msra.mxu0 0
    %245 = vmatprep.subr.bf16.mxu0 0
    %246 = vmatpush2.bf16.msra.mxu0 0
    %247 = vmatprep.subr.bf16.mxu0 0
    %248 = vmatpush2.bf16.msra.mxu0 0
    %249 = vmatprep.subr.bf16.mxu0 0
    %250 = vmatpush2.bf16.msra.mxu0 0
    %251 = vmatprep.subr.bf16.mxu0 0
    %252 = vmatpush2.bf16.msra.mxu0 0
    %253 = vmatprep.subr.bf16.mxu0 0
    %254 = vmatpush2.bf16.msra.mxu0 0
    %255 = vmatprep.subr.bf16.mxu0 0
    %256 = vmatpush2.bf16.msra.mxu0 0
    %257 = vmatprep.mubr.bf16.mxu0 0
    %258 = vmatmul.mubr.bf16.gmra.mxu0 %v223
    %v259 = vpop.f32.mrf.mxu0
    %v260 = vadd.f32 %v209, %v259
    %v261 = vpop.f32.mrf.mxu0
    %v262 = vpop.f32.mrf.mxu0
    %v263 = vpop.f32.mrf.mxu0
    %264 = vdwg.mxu0
    %v265 = vld [vmem:[#allocation2 + $0xc] sm:$0x8]
    %v266 = vunpack.c.l.bf16 %v265
    %v271 = vunpack.c.l.b16 %v204
    %v272 = vunpack.c.l.b16 %v205
    %v273 = vunpack.c.l.b16 %v206
    %v274 = vunpack.c.l.b16 %v207
    %v275 = vpack.c.b16 %v272, %v271
    %v276 = vpack.c.b16 %v274, %v273
    %v280 = vrot.slane %v266, 6
    %282 = vmatprep.subr.bf16.mxu0 0
    %283 = vmatpush1.bf16.msra.mxu0 0
    %284 = vmatprep.subr.bf16.mxu0 0
    %285 = vmatpush1.bf16.msra.mxu0 0
    %286 = vmatprep.subr.bf16.mxu0 0
    %287 = vmatpush1.bf16.msra.mxu0 0
    %288 = vmatprep.subr.bf16.mxu0 0
    %289 = vmatpush1.bf16.msra.mxu0 0
    %290 = vmatprep.subr.bf16.mxu0 0
    %291 = vmatpush1.bf16.msra.mxu0 0
    %292 = vmatprep.subr.bf16.mxu0 0
    %293 = vmatpush1.bf16.msra.mxu0 0
    %294 = vmatprep.subr.bf16.mxu0 0
    %295 = vmatpush1.bf16.msra.mxu0 %v276
    %296 = vmatprep.subr.bf16.mxu0 0
    %297 = vmatpush1.bf16.msra.mxu0 %v275
    %298 = vmatprep.subr.bf16.mxu0 0
    %299 = vmatpush2.bf16.msra.mxu0 0
    %300 = vmatprep.subr.bf16.mxu0 0
    %301 = vmatpush2.bf16.msra.mxu0 0
    %302 = vmatprep.subr.bf16.mxu0 0
    %303 = vmatpush2.bf16.msra.mxu0 0
    %304 = vmatprep.subr.bf16.mxu0 0
    %305 = vmatpush2.bf16.msra.mxu0 0
    %306 = vmatprep.subr.bf16.mxu0 0
    %307 = vmatpush2.bf16.msra.mxu0 0
    %308 = vmatprep.subr.bf16.mxu0 0
    %309 = vmatpush2.bf16.msra.mxu0 0
    %310 = vmatprep.subr.bf16.mxu0 0
    %311 = vmatpush2.bf16.msra.mxu0 0
    %312 = vmatprep.subr.bf16.mxu0 0
    %313 = vmatpush2.bf16.msra.mxu0 0
    %314 = vmatprep.mubr.bf16.mxu0 0
    %315 = vmatmul.mubr.bf16.gmra.mxu0 %v223
    %v316 = vpop.f32.mrf.mxu0
    %v317 = vadd.f32 %v280, %v316
    %v318 = vpop.f32.mrf.mxu0
    %v319 = vpop.f32.mrf.mxu0
    %v320 = vpop.f32.mrf.mxu0
    %321 = vdwg.mxu0
    %v322 = vxor.u32 %v260, 2147483648
    %v323 = vmul.f32 %v322, 1.442695
    %v324 = vpow.pop %v323
    %v325 = vadd.f32 %v324, 1.0
    %v326 = vrcp.pop %v325
    %v327 = vmul.f32 1.0, %v326
    %v328 = vtanh.pop %v260
    %v329 = vmul.f32 %v327, 0.0
    %331 = vrot.lane.b32.xlu0 %v328, 64
    %v332 = vpop.permute.xlu0 %331
    %v334 = vmul.f32 %v327, %v332
    %336 = vrot.lane.b32.xlu0 %v334, 32
    %v337 = vpop.permute.xlu0 %336
    %v339 = vadd.f32 %v329, %v337
    %v340 = vtanh.pop %v339
    %342 = vrot.lane.b32.xlu0 %v340, 64
    %v343 = vpop.permute.xlu0 %342
    %v345 = vmul.f32 %v327, %v343
    %v346 = vxor.u32 %v317, 2147483648
    %v347 = vmul.f32 %v346, 1.442695
    %v348 = vpow.pop %v347
    %v349 = vadd.f32 %v348, 1.0
    %v350 = vrcp.pop %v349
    %v351 = vmul.f32 1.0, %v350
    %v352 = vtanh.pop %v317
    %v353 = vmul.f32 %v351, 0.0
    %355 = vrot.lane.b32.xlu0 %v352, 64
    %v356 = vpop.permute.xlu0 %355
    %v358 = vmul.f32 %v351, %v356
    %360 = vrot.lane.b32.xlu0 %v358, 32
    %v361 = vpop.permute.xlu0 %360
    %v363 = vadd.f32 %v353, %v361
    %v364 = vtanh.pop %v363
    %366 = vrot.lane.b32.xlu0 %v364, 64
    %v367 = vpop.permute.xlu0 %366
    %v369 = vmul.f32 %v351, %v367
    %v370 = vpack.c.bf16 %v345, %v345
    %v372 = vunpack.c.l.b16 %v370
    %v373 = vpack.c.b16 %v372, %v372
    %374 = vrot.lane.b32.xlu0 %v373, 32
    %v375 = vpop.permute.xlu0 %374
    %vm377 = vcmask 253952
    %378 = vst.msk [vmem:[#allocation3] sm:$0x1] %vm377, %v375
    %v379 = vpack.c.bf16 %v369, %v369
    %v381 = vunpack.c.l.b16 %v379
    %v382 = vpack.c.b16 %v381, %v381
    %v383 = vrot.slane %v382, 5
    %384 = vrot.lane.b32.xlu0 %v383, 64
    %v385 = vpop.permute.xlu0 %384
    %vm387 = vcmask 519427
    %388 = vst.msk [vmem:[#allocation3 + $0x4] sm:$0x8] %vm387, %v385
    %v389 = vld [vmem:[#allocation2] sm:$0x2]
    %v390 = vunpack.c.l.bf16 %v389
    %391 = vrot.lane.b32.xlu0 %v370, 32
    %v392 = vpop.permute.xlu0 %391
    %v394 = vrot.slane %v390, 2
    %v397 = vsel %vm139, %v392, 0
    %399 = vmatprep.subr.bf16.mxu0 0
    %400 = vmatpush1.bf16.msra.mxu0 0
    %401 = vmatprep.subr.bf16.mxu0 0
    %402 = vmatpush1.bf16.msra.mxu0 0
    %403 = vmatprep.subr.bf16.mxu0 0
    %404 = vmatpush1.bf16.msra.mxu0 0
    %405 = vmatprep.subr.bf16.mxu0 0
    %406 = vmatpush1.bf16.msra.mxu0 0
    %407 = vmatprep.subr.bf16.mxu0 0
    %408 = vmatpush1.bf16.msra.mxu0 0
    %409 = vmatprep.subr.bf16.mxu0 0
    %410 = vmatpush1.bf16.msra.mxu0 0
    %411 = vmatprep.subr.bf16.mxu0 0
    %412 = vmatpush1.bf16.msra.mxu0 %v219
    %413 = vmatprep.subr.bf16.mxu0 0
    %414 = vmatpush1.bf16.msra.mxu0 %v218
    %415 = vmatprep.subr.bf16.mxu0 0
    %416 = vmatpush2.bf16.msra.mxu0 0
    %417 = vmatprep.subr.bf16.mxu0 0
    %418 = vmatpush2.bf16.msra.mxu0 0
    %419 = vmatprep.subr.bf16.mxu0 0
    %420 = vmatpush2.bf16.msra.mxu0 0
    %421 = vmatprep.subr.bf16.mxu0 0
    %422 = vmatpush2.bf16.msra.mxu0 0
    %423 = vmatprep.subr.bf16.mxu0 0
    %424 = vmatpush2.bf16.msra.mxu0 0
    %425 = vmatprep.subr.bf16.mxu0 0
    %426 = vmatpush2.bf16.msra.mxu0 0
    %427 = vmatprep.subr.bf16.mxu0 0
    %428 = vmatpush2.bf16.msra.mxu0 0
    %429 = vmatprep.subr.bf16.mxu0 0
    %430 = vmatpush2.bf16.msra.mxu0 0
    %431 = vmatprep.mubr.bf16.mxu0 0
    %432 = vmatmul.mubr.bf16.gmra.mxu0 %v397
    %v433 = vpop.f32.mrf.mxu0
    %v434 = vadd.f32 %v394, %v433
    %v435 = vpop.f32.mrf.mxu0
    %v436 = vpop.f32.mrf.mxu0
    %v437 = vpop.f32.mrf.mxu0
    %438 = vdwg.mxu0
    %v439 = vld [vmem:[#allocation2 + $0xc] sm:$0x4]
    %v440 = vunpack.c.l.bf16 %v439
    %441 = vrot.lane.b32.xlu0 %v379, 32
    %v442 = vpop.permute.xlu0 %441
    %v444 = vrot.slane %v440, 4
    %v447 = vsel %vm139, %v442, 0
    %449 = vmatprep.subr.bf16.mxu0 0
    %450 = vmatpush1.bf16.msra.mxu0 0
    %451 = vmatprep.subr.bf16.mxu0 0
    %452 = vmatpush1.bf16.msra.mxu0 0
    %453 = vmatprep.subr.bf16.mxu0 0
    %454 = vmatpush1.bf16.msra.mxu0 0
    %455 = vmatprep.subr.bf16.mxu0 0
    %456 = vmatpush1.bf16.msra.mxu0 0
    %457 = vmatprep.subr.bf16.mxu0 0
    %458 = vmatpush1.bf16.msra.mxu0 0
    %459 = vmatprep.subr.bf16.mxu0 0
    %460 = vmatpush1.bf16.msra.mxu0 0
    %461 = vmatprep.subr.bf16.mxu0 0
    %462 = vmatpush1.bf16.msra.mxu0 %v276
    %463 = vmatprep.subr.bf16.mxu0 0
    %464 = vmatpush1.bf16.msra.mxu0 %v275
    %465 = vmatprep.subr.bf16.mxu0 0
    %466 = vmatpush2.bf16.msra.mxu0 0
    %467 = vmatprep.subr.bf16.mxu0 0
    %468 = vmatpush2.bf16.msra.mxu0 0
    %469 = vmatprep.subr.bf16.mxu0 0
    %470 = vmatpush2.bf16.msra.mxu0 0
    %471 = vmatprep.subr.bf16.mxu0 0
    %472 = vmatpush2.bf16.msra.mxu0 0
    %473 = vmatprep.subr.bf16.mxu0 0
    %474 = vmatpush2.bf16.msra.mxu0 0
    %475 = vmatprep.subr.bf16.mxu0 0
    %476 = vmatpush2.bf16.msra.mxu0 0
    %477 = vmatprep.subr.bf16.mxu0 0
    %478 = vmatpush2.bf16.msra.mxu0 0
    %479 = vmatprep.subr.bf16.mxu0 0
    %480 = vmatpush2.bf16.msra.mxu0 0
    %481 = vmatprep.mubr.bf16.mxu0 0
    %482 = vmatmul.mubr.bf16.gmra.mxu0 %v447
    %v483 = vpop.f32.mrf.mxu0
    %v484 = vadd.f32 %v444, %v483
    %v485 = vpop.f32.mrf.mxu0
    %v486 = vpop.f32.mrf.mxu0
    %v487 = vpop.f32.mrf.mxu0
    %488 = vdwg.mxu0
    %v489 = vxor.u32 %v434, 2147483648
    %v490 = vmul.f32 %v489, 1.442695
    %v491 = vpow.pop %v490
    %v492 = vadd.f32 %v491, 1.0
    %v493 = vrcp.pop %v492
    %v494 = vmul.f32 1.0, %v493
    %v495 = vtanh.pop %v434
    %v496 = vmul.f32 %v494, %v339
    %498 = vrot.lane.b32.xlu0 %v495, 64
    %v499 = vpop.permute.xlu0 %498
    %v501 = vmul.f32 %v494, %v499
    %503 = vrot.lane.b32.xlu0 %v501, 32
    %v504 = vpop.permute.xlu0 %503
    %v506 = vadd.f32 %v496, %v504
    %v507 = vtanh.pop %v506
    %509 = vrot.lane.b32.xlu0 %v507, 64
    %v510 = vpop.permute.xlu0 %509
    %v512 = vmul.f32 %v494, %v510
    %v513 = vxor.u32 %v484, 2147483648
    %v514 = vmul.f32 %v513, 1.442695
    %v515 = vpow.pop %v514
    %v516 = vadd.f32 %v515, 1.0
    %v517 = vrcp.pop %v516
    %v518 = vmul.f32 1.0, %v517
    %v519 = vtanh.pop %v484
    %v520 = vmul.f32 %v518, %v363
    %522 = vrot.lane.b32.xlu0 %v519, 64
    %v523 = vpop.permute.xlu0 %522
    %v525 = vmul.f32 %v518, %v523
    %527 = vrot.lane.b32.xlu0 %v525, 32
    %v528 = vpop.permute.xlu0 %527
    %v530 = vadd.f32 %v520, %v528
    %v531 = vtanh.pop %v530
    %533 = vrot.lane.b32.xlu0 %v531, 64
    %v534 = vpop.permute.xlu0 %533
    %v536 = vmul.f32 %v518, %v534
    %v537 = vpack.c.bf16 %v512, %v512
    %v539 = vunpack.c.l.b16 %v537
    %v540 = vpack.c.b16 %v539, %v539
    %v541 = vrot.slane %v540, 7
    %542 = vrot.lane.b32.xlu0 %v541, 32
    %v543 = vpop.permute.xlu0 %542
    %vm545 = vcmask 254977
    %546 = vst.msk [vmem:[#allocation3] sm:$0x2] %vm545, %v543
    %v547 = vpack.c.bf16 %v536, %v536
    %v549 = vunpack.c.l.b16 %v547
    %v550 = vpack.c.b16 %v549, %v549
    %v551 = vrot.slane %v550, 6
    %552 = vrot.lane.b32.xlu0 %v551, 64
    %v553 = vpop.permute.xlu0 %552
    %vm555 = vcmask 518402
    %556 = vst.msk [vmem:[#allocation3 + $0x4] sm:$0x4] %vm555, %v553
    %v557 = vld [vmem:[#allocation2] sm:$0x4]
    %v558 = vunpack.c.l.bf16 %v557
    %559 = vrot.lane.b32.xlu0 %v537, 32
    %v560 = vpop.permute.xlu0 %559
    %v562 = vrot.slane %v558, 4
    %v565 = vsel %vm139, %v560, 0
    %567 = vmatprep.subr.bf16.mxu0 0
    %568 = vmatpush1.bf16.msra.mxu0 0
    %569 = vmatprep.subr.bf16.mxu0 0
    %570 = vmatpush1.bf16.msra.mxu0 0
    %571 = vmatprep.subr.bf16.mxu0 0
    %572 = vmatpush1.bf16.msra.mxu0 0
    %573 = vmatprep.subr.bf16.mxu0 0
    %574 = vmatpush1.bf16.msra.mxu0 0
    %575 = vmatprep.subr.bf16.mxu0 0
    %576 = vmatpush1.bf16.msra.mxu0 0
    %577 = vmatprep.subr.bf16.mxu0 0
    %578 = vmatpush1.bf16.msra.mxu0 0
    %579 = vmatprep.subr.bf16.mxu0 0
    %580 = vmatpush1.bf16.msra.mxu0 %v219
    %581 = vmatprep.subr.bf16.mxu0 0
    %582 = vmatpush1.bf16.msra.mxu0 %v218
    %583 = vmatprep.subr.bf16.mxu0 0
    %584 = vmatpush2.bf16.msra.mxu0 0
    %585 = vmatprep.subr.bf16.mxu0 0
    %586 = vmatpush2.bf16.msra.mxu0 0
    %587 = vmatprep.subr.bf16.mxu0 0
    %588 = vmatpush2.bf16.msra.mxu0 0
    %589 = vmatprep.subr.bf16.mxu0 0
    %590 = vmatpush2.bf16.msra.mxu0 0
    %591 = vmatprep.subr.bf16.mxu0 0
    %592 = vmatpush2.bf16.msra.mxu0 0
    %593 = vmatprep.subr.bf16.mxu0 0
    %594 = vmatpush2.bf16.msra.mxu0 0
    %595 = vmatprep.subr.bf16.mxu0 0
    %596 = vmatpush2.bf16.msra.mxu0 0
    %597 = vmatprep.subr.bf16.mxu0 0
    %598 = vmatpush2.bf16.msra.mxu0 0
    %599 = vmatprep.mubr.bf16.mxu0 0
    %600 = vmatmul.mubr.bf16.gmra.mxu0 %v565
    %v601 = vpop.f32.mrf.mxu0
    %v602 = vadd.f32 %v562, %v601
    %v603 = vpop.f32.mrf.mxu0
    %v604 = vpop.f32.mrf.mxu0
    %v605 = vpop.f32.mrf.mxu0
    %606 = vdwg.mxu0
    %v607 = vld [vmem:[#allocation2 + $0xc] sm:$0x2]
    %v608 = vunpack.c.l.bf16 %v607
    %609 = vrot.lane.b32.xlu0 %v547, 32
    %v610 = vpop.permute.xlu0 %609
    %v612 = vrot.slane %v608, 2
    %v615 = vsel %vm139, %v610, 0
    %617 = vmatprep.subr.bf16.mxu0 0
    %618 = vmatpush1.bf16.msra.mxu0 0
    %619 = vmatprep.subr.bf16.mxu0 0
    %620 = vmatpush1.bf16.msra.mxu0 0
    %621 = vmatprep.subr.bf16.mxu0 0
    %622 = vmatpush1.bf16.msra.mxu0 0
    %623 = vmatprep.subr.bf16.mxu0 0
    %624 = vmatpush1.bf16.msra.mxu0 0
    %625 = vmatprep.subr.bf16.mxu0 0
    %626 = vmatpush1.bf16.msra.mxu0 0
    %627 = vmatprep.subr.bf16.mxu0 0
    %628 = vmatpush1.bf16.msra.mxu0 0
    %629 = vmatprep.subr.bf16.mxu0 0
    %630 = vmatpush1.bf16.msra.mxu0 %v276
    %631 = vmatprep.subr.bf16.mxu0 0
    %632 = vmatpush1.bf16.msra.mxu0 %v275
    %633 = vmatprep.subr.bf16.mxu0 0
    %634 = vmatpush2.bf16.msra.mxu0 0
    %635 = vmatprep.subr.bf16.mxu0 0
    %636 = vmatpush2.bf16.msra.mxu0 0
    %637 = vmatprep.subr.bf16.mxu0 0
    %638 = vmatpush2.bf16.msra.mxu0 0
    %639 = vmatprep.subr.bf16.mxu0 0
    %640 = vmatpush2.bf16.msra.mxu0 0
    %641 = vmatprep.subr.bf16.mxu0 0
    %642 = vmatpush2.bf16.msra.mxu0 0
    %643 = vmatprep.subr.bf16.mxu0 0
    %644 = vmatpush2.bf16.msra.mxu0 0
    %645 = vmatprep.subr.bf16.mxu0 0
    %646 = vmatpush2.bf16.msra.mxu0 0
    %647 = vmatprep.subr.bf16.mxu0 0
    %648 = vmatpush2.bf16.msra.mxu0 0
    %649 = vmatprep.mubr.bf16.mxu0 0
    %650 = vmatmul.mubr.bf16.gmra.mxu0 %v615
    %v651 = vpop.f32.mrf.mxu0
    %v652 = vadd.f32 %v612, %v651
    %v653 = vpop.f32.mrf.mxu0
    %v654 = vpop.f32.mrf.mxu0
    %v655 = vpop.f32.mrf.mxu0
    %656 = vdwg.mxu0
    %v657 = vxor.u32 %v602, 2147483648
    %v658 = vmul.f32 %v657, 1.442695
    %v659 = vpow.pop %v658
    %v660 = vadd.f32 %v659, 1.0
    %v661 = vrcp.pop %v660
    %v662 = vmul.f32 1.0, %v661
    %v663 = vtanh.pop %v602
    %v664 = vmul.f32 %v662, %v506
    %666 = vrot.lane.b32.xlu0 %v663, 64
    %v667 = vpop.permute.xlu0 %666
    %v669 = vmul.f32 %v662, %v667
    %671 = vrot.lane.b32.xlu0 %v669, 32
    %v672 = vpop.permute.xlu0 %671
    %v674 = vadd.f32 %v664, %v672
    %v675 = vtanh.pop %v674
    %677 = vrot.lane.b32.xlu0 %v675, 64
    %v678 = vpop.permute.xlu0 %677
    %v680 = vmul.f32 %v662, %v678
    %v681 = vxor.u32 %v652, 2147483648
    %v682 = vmul.f32 %v681, 1.442695
    %v683 = vpow.pop %v682
    %v684 = vadd.f32 %v683, 1.0
    %v685 = vrcp.pop %v684
    %v686 = vmul.f32 1.0, %v685
    %v687 = vtanh.pop %v652
    %v688 = vmul.f32 %v686, %v530
    %690 = vrot.lane.b32.xlu0 %v687, 64
    %v691 = vpop.permute.xlu0 %690
    %v693 = vmul.f32 %v686, %v691
    %695 = vrot.lane.b32.xlu0 %v693, 32
    %v696 = vpop.permute.xlu0 %695
    %v698 = vadd.f32 %v688, %v696
    %v699 = vtanh.pop %v698
    %701 = vrot.lane.b32.xlu0 %v699, 64
    %v702 = vpop.permute.xlu0 %701
    %v704 = vmul.f32 %v686, %v702
    %v705 = vpack.c.bf16 %v680, %v680
    %v707 = vunpack.c.l.b16 %v705
    %v708 = vpack.c.b16 %v707, %v707
    %v709 = vrot.slane %v708, 6
    %710 = vrot.lane.b32.xlu0 %v709, 32
    %v711 = vpop.permute.xlu0 %710
    %vm713 = vcmask 256002
    %714 = vst.msk [vmem:[#allocation3] sm:$0x4] %vm713, %v711
    %v715 = vpack.c.bf16 %v704, %v704
    %v717 = vunpack.c.l.b16 %v715
    %v718 = vpack.c.b16 %v717, %v717
    %v719 = vrot.slane %v718, 7
    %720 = vrot.lane.b32.xlu0 %v719, 64
    %v721 = vpop.permute.xlu0 %720
    %vm723 = vcmask 517377
    %724 = vst.msk [vmem:[#allocation3 + $0x4] sm:$0x2] %vm723, %v721
    %v725 = vld [vmem:[#allocation2] sm:$0x8]
    %v726 = vunpack.c.l.bf16 %v725
    %727 = vrot.lane.b32.xlu0 %v705, 32
    %v728 = vpop.permute.xlu0 %727
    %v730 = vrot.slane %v726, 6
    %v733 = vsel %vm139, %v728, 0
    %735 = vmatprep.subr.bf16.mxu0 0
    %736 = vmatpush1.bf16.msra.mxu0 0
    %737 = vmatprep.subr.bf16.mxu0 0
    %738 = vmatpush1.bf16.msra.mxu0 0
    %739 = vmatprep.subr.bf16.mxu0 0
    %740 = vmatpush1.bf16.msra.mxu0 0
    %741 = vmatprep.subr.bf16.mxu0 0
    %742 = vmatpush1.bf16.msra.mxu0 0
    %743 = vmatprep.subr.bf16.mxu0 0
    %744 = vmatpush1.bf16.msra.mxu0 0
    %745 = vmatprep.subr.bf16.mxu0 0
    %746 = vmatpush1.bf16.msra.mxu0 0
    %747 = vmatprep.subr.bf16.mxu0 0
    %748 = vmatpush1.bf16.msra.mxu0 %v219
    %749 = vmatprep.subr.bf16.mxu0 0
    %750 = vmatpush1.bf16.msra.mxu0 %v218
    %751 = vmatprep.subr.bf16.mxu0 0
    %752 = vmatpush2.bf16.msra.mxu0 0
    %753 = vmatprep.subr.bf16.mxu0 0
    %754 = vmatpush2.bf16.msra.mxu0 0
    %755 = vmatprep.subr.bf16.mxu0 0
    %756 = vmatpush2.bf16.msra.mxu0 0
    %757 = vmatprep.subr.bf16.mxu0 0
    %758 = vmatpush2.bf16.msra.mxu0 0
    %759 = vmatprep.subr.bf16.mxu0 0
    %760 = vmatpush2.bf16.msra.mxu0 0
    %761 = vmatprep.subr.bf16.mxu0 0
    %762 = vmatpush2.bf16.msra.mxu0 0
    %763 = vmatprep.subr.bf16.mxu0 0
    %764 = vmatpush2.bf16.msra.mxu0 0
    %765 = vmatprep.subr.bf16.mxu0 0
    %766 = vmatpush2.bf16.msra.mxu0 0
    %767 = vmatprep.mubr.bf16.mxu0 0
    %768 = vmatmul.mubr.bf16.gmra.mxu0 %v733
    %v769 = vpop.f32.mrf.mxu0
    %v770 = vadd.f32 %v730, %v769
    %v771 = vpop.f32.mrf.mxu0
    %v772 = vpop.f32.mrf.mxu0
    %v773 = vpop.f32.mrf.mxu0
    %774 = vdwg.mxu0
    %v775 = vld [vmem:[#allocation2 + $0xc] sm:$0x1]
    %v776 = vunpack.c.l.bf16 %v775
    %777 = vrot.lane.b32.xlu0 %v715, 32
    %v778 = vpop.permute.xlu0 %777
    %v780 = vsel %vm139, %v778, 0
    %782 = vmatprep.subr.bf16.mxu0 0
    %783 = vmatpush1.bf16.msra.mxu0 0
    %784 = vmatprep.subr.bf16.mxu0 0
    %785 = vmatpush1.bf16.msra.mxu0 0
    %786 = vmatprep.subr.bf16.mxu0 0
    %787 = vmatpush1.bf16.msra.mxu0 0
    %788 = vmatprep.subr.bf16.mxu0 0
    %789 = vmatpush1.bf16.msra.mxu0 0
    %790 = vmatprep.subr.bf16.mxu0 0
    %791 = vmatpush1.bf16.msra.mxu0 0
    %792 = vmatprep.subr.bf16.mxu0 0
    %793 = vmatpush1.bf16.msra.mxu0 0
    %794 = vmatprep.subr.bf16.mxu0 0
    %795 = vmatpush1.bf16.msra.mxu0 %v276
    %796 = vmatprep.subr.bf16.mxu0 0
    %797 = vmatpush1.bf16.msra.mxu0 %v275
    %798 = vmatprep.subr.bf16.mxu0 0
    %799 = vmatpush2.bf16.msra.mxu0 0
    %800 = vmatprep.subr.bf16.mxu0 0
    %801 = vmatpush2.bf16.msra.mxu0 0
    %802 = vmatprep.subr.bf16.mxu0 0
    %803 = vmatpush2.bf16.msra.mxu0 0
    %804 = vmatprep.subr.bf16.mxu0 0
    %805 = vmatpush2.bf16.msra.mxu0 0
    %806 = vmatprep.subr.bf16.mxu0 0
    %807 = vmatpush2.bf16.msra.mxu0 0
    %808 = vmatprep.subr.bf16.mxu0 0
    %809 = vmatpush2.bf16.msra.mxu0 0
    %810 = vmatprep.subr.bf16.mxu0 0
    %811 = vmatpush2.bf16.msra.mxu0 0
    %812 = vmatprep.subr.bf16.mxu0 0
    %813 = vmatpush2.bf16.msra.mxu0 0
    %814 = vmatprep.mubr.bf16.mxu0 0
    %815 = vmatmul.mubr.bf16.gmra.mxu0 %v780
    %v816 = vpop.f32.mrf.mxu0
    %v817 = vadd.f32 %v776, %v816
    %v818 = vpop.f32.mrf.mxu0
    %v819 = vpop.f32.mrf.mxu0
    %v820 = vpop.f32.mrf.mxu0
    %821 = vdwg.mxu0
    %v822 = vxor.u32 %v770, 2147483648
    %v823 = vmul.f32 %v822, 1.442695
    %v824 = vpow.pop %v823
    %v825 = vadd.f32 %v824, 1.0
    %v826 = vrcp.pop %v825
    %v827 = vmul.f32 1.0, %v826
    %v828 = vtanh.pop %v770
    %v829 = vmul.f32 %v827, %v674
    %831 = vrot.lane.b32.xlu0 %v828, 64
    %v832 = vpop.permute.xlu0 %831
    %v834 = vmul.f32 %v827, %v832
    %836 = vrot.lane.b32.xlu0 %v834, 32
    %v837 = vpop.permute.xlu0 %836
    %v839 = vadd.f32 %v829, %v837
    %v840 = vtanh.pop %v839
    %842 = vrot.lane.b32.xlu0 %v840, 64
    %v843 = vpop.permute.xlu0 %842
    %v845 = vmul.f32 %v827, %v843
    %v846 = vxor.u32 %v817, 2147483648
    %v847 = vmul.f32 %v846, 1.442695
    %v848 = vpow.pop %v847
    %v849 = vadd.f32 %v848, 1.0
    %v850 = vrcp.pop %v849
    %v851 = vmul.f32 1.0, %v850
    %v852 = vtanh.pop %v817
    %v853 = vmul.f32 %v851, %v698
    %855 = vrot.lane.b32.xlu0 %v852, 64
    %v856 = vpop.permute.xlu0 %855
    %v858 = vmul.f32 %v851, %v856
    %860 = vrot.lane.b32.xlu0 %v858, 32
    %v861 = vpop.permute.xlu0 %860
    %v863 = vadd.f32 %v853, %v861
    %v864 = vtanh.pop %v863
    %866 = vrot.lane.b32.xlu0 %v864, 64
    %v867 = vpop.permute.xlu0 %866
    %v869 = vmul.f32 %v851, %v867
    %v870 = vpack.c.bf16 %v845, %v845
    %v872 = vunpack.c.l.b16 %v870
    %v873 = vpack.c.b16 %v872, %v872
    %v874 = vrot.slane %v873, 5
    %875 = vrot.lane.b32.xlu0 %v874, 32
    %v876 = vpop.permute.xlu0 %875
    %vm878 = vcmask 257027
    %879 = vst.msk [vmem:[#allocation3] sm:$0x8] %vm878, %v876
    %v880 = vpack.c.bf16 %v869, %v869
    %v882 = vunpack.c.l.b16 %v880
    %v883 = vpack.c.b16 %v882, %v882
    %884 = vrot.lane.b32.xlu0 %v883, 64
    %v885 = vpop.permute.xlu0 %884
    %vm887 = vcmask 516352
    %888 = vst.msk [vmem:[#allocation3 + $0x4] sm:$0x1] %vm887, %v885
    %v889 = vld [vmem:[#allocation2 + $0x8] sm:$0x1]
    %v890 = vunpack.c.l.bf16 %v889
    %891 = vrot.lane.b32.xlu0 %v870, 32
    %v892 = vpop.permute.xlu0 %891
    %v894 = vsel %vm139, %v892, 0
    %896 = vmatprep.subr.bf16.mxu0 0
    %897 = vmatpush1.bf16.msra.mxu0 0
    %898 = vmatprep.subr.bf16.mxu0 0
    %899 = vmatpush1.bf16.msra.mxu0 0
    %900 = vmatprep.subr.bf16.mxu0 0
    %901 = vmatpush1.bf16.msra.mxu0 0
    %902 = vmatprep.subr.bf16.mxu0 0
    %903 = vmatpush1.bf16.msra.mxu0 0
    %904 = vmatprep.subr.bf16.mxu0 0
    %905 = vmatpush1.bf16.msra.mxu0 0
    %906 = vmatprep.subr.bf16.mxu0 0
    %907 = vmatpush1.bf16.msra.mxu0 0
    %908 = vmatprep.subr.bf16.mxu0 0
    %909 = vmatpush1.bf16.msra.mxu0 %v219
    %910 = vmatprep.subr.bf16.mxu0 0
    %911 = vmatpush1.bf16.msra.mxu0 %v218
    %912 = vmatprep.subr.bf16.mxu0 0
    %913 = vmatpush2.bf16.msra.mxu0 0
    %914 = vmatprep.subr.bf16.mxu0 0
    %915 = vmatpush2.bf16.msra.mxu0 0
    %916 = vmatprep.subr.bf16.mxu0 0
    %917 = vmatpush2.bf16.msra.mxu0 0
    %918 = vmatprep.subr.bf16.mxu0 0
    %919 = vmatpush2.bf16.msra.mxu0 0
    %920 = vmatprep.subr.bf16.mxu0 0
    %921 = vmatpush2.bf16.msra.mxu0 0
    %922 = vmatprep.subr.bf16.mxu0 0
    %923 = vmatpush2.bf16.msra.mxu0 0
    %924 = vmatprep.subr.bf16.mxu0 0
    %925 = vmatpush2.bf16.msra.mxu0 0
    %926 = vmatprep.subr.bf16.mxu0 0
    %927 = vmatpush2.bf16.msra.mxu0 0
    %928 = vmatprep.mubr.bf16.mxu0 0
    %929 = vmatmul.mubr.bf16.gmra.mxu0 %v894
    %v930 = vpop.f32.mrf.mxu0
    %v931 = vadd.f32 %v890, %v930
    %v932 = vpop.f32.mrf.mxu0
    %v933 = vpop.f32.mrf.mxu0
    %v934 = vpop.f32.mrf.mxu0
    %935 = vdwg.mxu0
    %v936 = vld [vmem:[#allocation2 + $0x4] sm:$0x8]
    %v937 = vunpack.c.l.bf16 %v936
    %938 = vrot.lane.b32.xlu0 %v880, 32
    %v939 = vpop.permute.xlu0 %938
    %v941 = vrot.slane %v937, 6
    %v944 = vsel %vm139, %v939, 0
    %946 = vmatprep.subr.bf16.mxu0 0
    %947 = vmatpush1.bf16.msra.mxu0 0
    %948 = vmatprep.subr.bf16.mxu0 0
    %949 = vmatpush1.bf16.msra.mxu0 0
    %950 = vmatprep.subr.bf16.mxu0 0
    %951 = vmatpush1.bf16.msra.mxu0 0
    %952 = vmatprep.subr.bf16.mxu0 0
    %953 = vmatpush1.bf16.msra.mxu0 0
    %954 = vmatprep.subr.bf16.mxu0 0
    %955 = vmatpush1.bf16.msra.mxu0 0
    %956 = vmatprep.subr.bf16.mxu0 0
    %957 = vmatpush1.bf16.msra.mxu0 0
    %958 = vmatprep.subr.bf16.mxu0 0
    %959 = vmatpush1.bf16.msra.mxu0 %v276
    %960 = vmatprep.subr.bf16.mxu0 0
    %961 = vmatpush1.bf16.msra.mxu0 %v275
    %962 = vmatprep.subr.bf16.mxu0 0
    %963 = vmatpush2.bf16.msra.mxu0 0
    %964 = vmatprep.subr.bf16.mxu0 0
    %965 = vmatpush2.bf16.msra.mxu0 0
    %966 = vmatprep.subr.bf16.mxu0 0
    %967 = vmatpush2.bf16.msra.mxu0 0
    %968 = vmatprep.subr.bf16.mxu0 0
    %969 = vmatpush2.bf16.msra.mxu0 0
    %970 = vmatprep.subr.bf16.mxu0 0
    %971 = vmatpush2.bf16.msra.mxu0 0
    %972 = vmatprep.subr.bf16.mxu0 0
    %973 = vmatpush2.bf16.msra.mxu0 0
    %974 = vmatprep.subr.bf16.mxu0 0
    %975 = vmatpush2.bf16.msra.mxu0 0
    %976 = vmatprep.subr.bf16.mxu0 0
    %977 = vmatpush2.bf16.msra.mxu0 0
    %978 = vmatprep.mubr.bf16.mxu0 0
    %979 = vmatmul.mubr.bf16.gmra.mxu0 %v944
    %v980 = vpop.f32.mrf.mxu0
    %v981 = vadd.f32 %v941, %v980
    %v982 = vpop.f32.mrf.mxu0
    %v983 = vpop.f32.mrf.mxu0
    %v984 = vpop.f32.mrf.mxu0
    %985 = vdwg.mxu0
    %v986 = vxor.u32 %v931, 2147483648
    %v987 = vmul.f32 %v986, 1.442695
    %v988 = vpow.pop %v987
    %v989 = vadd.f32 %v988, 1.0
    %v990 = vrcp.pop %v989
    %v991 = vmul.f32 1.0, %v990
    %v992 = vtanh.pop %v931
    %v993 = vmul.f32 %v991, %v839
    %995 = vrot.lane.b32.xlu0 %v992, 64
    %v996 = vpop.permute.xlu0 %995
    %v998 = vmul.f32 %v991, %v996
    %1000 = vrot.lane.b32.xlu0 %v998, 32
    %v1001 = vpop.permute.xlu0 %1000
    %v1003 = vadd.f32 %v993, %v1001
    %v1004 = vtanh.pop %v1003
    %1006 = vrot.lane.b32.xlu0 %v1004, 64
    %v1007 = vpop.permute.xlu0 %1006
    %v1009 = vmul.f32 %v991, %v1007
    %v1010 = vxor.u32 %v981, 2147483648
    %v1011 = vmul.f32 %v1010, 1.442695
    %v1012 = vpow.pop %v1011
    %v1013 = vadd.f32 %v1012, 1.0
    %v1014 = vrcp.pop %v1013
    %v1015 = vmul.f32 1.0, %v1014
    %v1016 = vtanh.pop %v981
    %v1017 = vmul.f32 %v1015, %v863
    %1019 = vrot.lane.b32.xlu0 %v1016, 64
    %v1020 = vpop.permute.xlu0 %1019
    %v1022 = vmul.f32 %v1015, %v1020
    %1024 = vrot.lane.b32.xlu0 %v1022, 32
    %v1025 = vpop.permute.xlu0 %1024
    %v1027 = vadd.f32 %v1017, %v1025
    %v1028 = vtanh.pop %v1027
    %1030 = vrot.lane.b32.xlu0 %v1028, 64
    %v1031 = vpop.permute.xlu0 %1030
    %v1033 = vmul.f32 %v1015, %v1031
    %v1034 = vpack.c.bf16 %v1009, %v1009
    %v1036 = vunpack.c.l.b16 %v1034
    %v1037 = vpack.c.b16 %v1036, %v1036
    %1038 = vrot.lane.b32.xlu0 %v1037, 32
    %v1039 = vpop.permute.xlu0 %1038
    %1041 = vst.msk [vmem:[#allocation3 + $0x4] sm:$0x1] %vm377, %v1039
    %v1042 = vpack.c.bf16 %v1033, %v1033
    %v1044 = vunpack.c.l.b16 %v1042
    %v1045 = vpack.c.b16 %v1044, %v1044
    %v1046 = vrot.slane %v1045, 5
    %1047 = vrot.lane.b32.xlu0 %v1046, 64
    %v1048 = vpop.permute.xlu0 %1047
    %1050 = vst.msk [vmem:[#allocation3] sm:$0x8] %vm387, %v1048
    %v1051 = vld [vmem:[#allocation2 + $0x8] sm:$0x2]
    %v1052 = vunpack.c.l.bf16 %v1051
    %1053 = vrot.lane.b32.xlu0 %v1034, 32
    %v1054 = vpop.permute.xlu0 %1053
    %v1056 = vrot.slane %v1052, 2
    %v1059 = vsel %vm139, %v1054, 0
    %1061 = vmatprep.subr.bf16.mxu0 0
    %1062 = vmatpush1.bf16.msra.mxu0 0
    %1063 = vmatprep.subr.bf16.mxu0 0
    %1064 = vmatpush1.bf16.msra.mxu0 0
    %1065 = vmatprep.subr.bf16.mxu0 0
    %1066 = vmatpush1.bf16.msra.mxu0 0
    %1067 = vmatprep.subr.bf16.mxu0 0
    %1068 = vmatpush1.bf16.msra.mxu0 0
    %1069 = vmatprep.subr.bf16.mxu0 0
    %1070 = vmatpush1.bf16.msra.mxu0 0
    %1071 = vmatprep.subr.bf16.mxu0 0
    %1072 = vmatpush1.bf16.msra.mxu0 0
    %1073 = vmatprep.subr.bf16.mxu0 0
    %1074 = vmatpush1.bf16.msra.mxu0 %v219
    %1075 = vmatprep.subr.bf16.mxu0 0
    %1076 = vmatpush1.bf16.msra.mxu0 %v218
    %1077 = vmatprep.subr.bf16.mxu0 0
    %1078 = vmatpush2.bf16.msra.mxu0 0
    %1079 = vmatprep.subr.bf16.mxu0 0
    %1080 = vmatpush2.bf16.msra.mxu0 0
    %1081 = vmatprep.subr.bf16.mxu0 0
    %1082 = vmatpush2.bf16.msra.mxu0 0
    %1083 = vmatprep.subr.bf16.mxu0 0
    %1084 = vmatpush2.bf16.msra.mxu0 0
    %1085 = vmatprep.subr.bf16.mxu0 0
    %1086 = vmatpush2.bf16.msra.mxu0 0
    %1087 = vmatprep.subr.bf16.mxu0 0
    %1088 = vmatpush2.bf16.msra.mxu0 0
    %1089 = vmatprep.subr.bf16.mxu0 0
    %1090 = vmatpush2.bf16.msra.mxu0 0
    %1091 = vmatprep.subr.bf16.mxu0 0
    %1092 = vmatpush2.bf16.msra.mxu0 0
    %1093 = vmatprep.mubr.bf16.mxu0 0
    %1094 = vmatmul.mubr.bf16.gmra.mxu0 %v1059
    %v1095 = vpop.f32.mrf.mxu0
    %v1096 = vadd.f32 %v1056, %v1095
    %v1097 = vpop.f32.mrf.mxu0
    %v1098 = vpop.f32.mrf.mxu0
    %v1099 = vpop.f32.mrf.mxu0
    %1100 = vdwg.mxu0
    %v1101 = vld [vmem:[#allocation2 + $0x4] sm:$0x4]
    %v1102 = vunpack.c.l.bf16 %v1101
    %1103 = vrot.lane.b32.xlu0 %v1042, 32
    %v1104 = vpop.permute.xlu0 %1103
    %v1106 = vrot.slane %v1102, 4
    %v1109 = vsel %vm139, %v1104, 0
    %1111 = vmatprep.subr.bf16.mxu0 0
    %1112 = vmatpush1.bf16.msra.mxu0 0
    %1113 = vmatprep.subr.bf16.mxu0 0
    %1114 = vmatpush1.bf16.msra.mxu0 0
    %1115 = vmatprep.subr.bf16.mxu0 0
    %1116 = vmatpush1.bf16.msra.mxu0 0
    %1117 = vmatprep.subr.bf16.mxu0 0
    %1118 = vmatpush1.bf16.msra.mxu0 0
    %1119 = vmatprep.subr.bf16.mxu0 0
    %1120 = vmatpush1.bf16.msra.mxu0 0
    %1121 = vmatprep.subr.bf16.mxu0 0
    %1122 = vmatpush1.bf16.msra.mxu0 0
    %1123 = vmatprep.subr.bf16.mxu0 0
    %1124 = vmatpush1.bf16.msra.mxu0 %v276
    %1125 = vmatprep.subr.bf16.mxu0 0
    %1126 = vmatpush1.bf16.msra.mxu0 %v275
    %1127 = vmatprep.subr.bf16.mxu0 0
    %1128 = vmatpush2.bf16.msra.mxu0 0
    %1129 = vmatprep.subr.bf16.mxu0 0
    %1130 = vmatpush2.bf16.msra.mxu0 0
    %1131 = vmatprep.subr.bf16.mxu0 0
    %1132 = vmatpush2.bf16.msra.mxu0 0
    %1133 = vmatprep.subr.bf16.mxu0 0
    %1134 = vmatpush2.bf16.msra.mxu0 0
    %1135 = vmatprep.subr.bf16.mxu0 0
    %1136 = vmatpush2.bf16.msra.mxu0 0
    %1137 = vmatprep.subr.bf16.mxu0 0
    %1138 = vmatpush2.bf16.msra.mxu0 0
    %1139 = vmatprep.subr.bf16.mxu0 0
    %1140 = vmatpush2.bf16.msra.mxu0 0
    %1141 = vmatprep.subr.bf16.mxu0 0
    %1142 = vmatpush2.bf16.msra.mxu0 0
    %1143 = vmatprep.mubr.bf16.mxu0 0
    %1144 = vmatmul.mubr.bf16.gmra.mxu0 %v1109
    %v1145 = vpop.f32.mrf.mxu0
    %v1146 = vadd.f32 %v1106, %v1145
    %v1147 = vpop.f32.mrf.mxu0
    %v1148 = vpop.f32.mrf.mxu0
    %v1149 = vpop.f32.mrf.mxu0
    %1150 = vdwg.mxu0
    %v1151 = vxor.u32 %v1096, 2147483648
    %v1152 = vmul.f32 %v1151, 1.442695
    %v1153 = vpow.pop %v1152
    %v1154 = vadd.f32 %v1153, 1.0
    %v1155 = vrcp.pop %v1154
    %v1156 = vmul.f32 1.0, %v1155
    %v1157 = vtanh.pop %v1096
    %v1158 = vmul.f32 %v1156, %v1003
    %1160 = vrot.lane.b32.xlu0 %v1157, 64
    %v1161 = vpop.permute.xlu0 %1160
    %v1163 = vmul.f32 %v1156, %v1161
    %1165 = vrot.lane.b32.xlu0 %v1163, 32
    %v1166 = vpop.permute.xlu0 %1165
    %v1168 = vadd.f32 %v1158, %v1166
    %v1169 = vtanh.pop %v1168
    %1171 = vrot.lane.b32.xlu0 %v1169, 64
    %v1172 = vpop.permute.xlu0 %1171
    %v1174 = vmul.f32 %v1156, %v1172
    %v1175 = vxor.u32 %v1146, 2147483648
    %v1176 = vmul.f32 %v1175, 1.442695
    %v1177 = vpow.pop %v1176
    %v1178 = vadd.f32 %v1177, 1.0
    %v1179 = vrcp.pop %v1178
    %v1180 = vmul.f32 1.0, %v1179
    %v1181 = vtanh.pop %v1146
    %v1182 = vmul.f32 %v1180, %v1027
    %1184 = vrot.lane.b32.xlu0 %v1181, 64
    %v1185 = vpop.permute.xlu0 %1184
    %v1187 = vmul.f32 %v1180, %v1185
    %1189 = vrot.lane.b32.xlu0 %v1187, 32
    %v1190 = vpop.permute.xlu0 %1189
    %v1192 = vadd.f32 %v1182, %v1190
    %v1193 = vtanh.pop %v1192
    %1195 = vrot.lane.b32.xlu0 %v1193, 64
    %v1196 = vpop.permute.xlu0 %1195
    %v1198 = vmul.f32 %v1180, %v1196
    %v1199 = vpack.c.bf16 %v1174, %v1174
    %v1201 = vunpack.c.l.b16 %v1199
    %v1202 = vpack.c.b16 %v1201, %v1201
    %v1203 = vrot.slane %v1202, 7
    %1204 = vrot.lane.b32.xlu0 %v1203, 32
    %v1205 = vpop.permute.xlu0 %1204
    %1207 = vst.msk [vmem:[#allocation3 + $0x4] sm:$0x2] %vm545, %v1205
    %v1208 = vpack.c.bf16 %v1198, %v1198
    %v1210 = vunpack.c.l.b16 %v1208
    %v1211 = vpack.c.b16 %v1210, %v1210
    %v1212 = vrot.slane %v1211, 6
    %1213 = vrot.lane.b32.xlu0 %v1212, 64
    %v1214 = vpop.permute.xlu0 %1213
    %1216 = vst.msk [vmem:[#allocation3] sm:$0x4] %vm555, %v1214
    %v1217 = vld [vmem:[#allocation2 + $0x8] sm:$0x4]
    %v1218 = vunpack.c.l.bf16 %v1217
    %1219 = vrot.lane.b32.xlu0 %v1199, 32
    %v1220 = vpop.permute.xlu0 %1219
    %v1222 = vrot.slane %v1218, 4
    %v1225 = vsel %vm139, %v1220, 0
    %1227 = vmatprep.subr.bf16.mxu0 0
    %1228 = vmatpush1.bf16.msra.mxu0 0
    %1229 = vmatprep.subr.bf16.mxu0 0
    %1230 = vmatpush1.bf16.msra.mxu0 0
    %1231 = vmatprep.subr.bf16.mxu0 0
    %1232 = vmatpush1.bf16.msra.mxu0 0
    %1233 = vmatprep.subr.bf16.mxu0 0
    %1234 = vmatpush1.bf16.msra.mxu0 0
    %1235 = vmatprep.subr.bf16.mxu0 0
    %1236 = vmatpush1.bf16.msra.mxu0 0
    %1237 = vmatprep.subr.bf16.mxu0 0
    %1238 = vmatpush1.bf16.msra.mxu0 0
    %1239 = vmatprep.subr.bf16.mxu0 0
    %1240 = vmatpush1.bf16.msra.mxu0 %v219
    %1241 = vmatprep.subr.bf16.mxu0 0
    %1242 = vmatpush1.bf16.msra.mxu0 %v218
    %1243 = vmatprep.subr.bf16.mxu0 0
    %1244 = vmatpush2.bf16.msra.mxu0 0
    %1245 = vmatprep.subr.bf16.mxu0 0
    %1246 = vmatpush2.bf16.msra.mxu0 0
    %1247 = vmatprep.subr.bf16.mxu0 0
    %1248 = vmatpush2.bf16.msra.mxu0 0
    %1249 = vmatprep.subr.bf16.mxu0 0
    %1250 = vmatpush2.bf16.msra.mxu0 0
    %1251 = vmatprep.subr.bf16.mxu0 0
    %1252 = vmatpush2.bf16.msra.mxu0 0
    %1253 = vmatprep.subr.bf16.mxu0 0
    %1254 = vmatpush2.bf16.msra.mxu0 0
    %1255 = vmatprep.subr.bf16.mxu0 0
    %1256 = vmatpush2.bf16.msra.mxu0 0
    %1257 = vmatprep.subr.bf16.mxu0 0
    %1258 = vmatpush2.bf16.msra.mxu0 0
    %1259 = vmatprep.mubr.bf16.mxu0 0
    %1260 = vmatmul.mubr.bf16.gmra.mxu0 %v1225
    %v1261 = vpop.f32.mrf.mxu0
    %v1262 = vadd.f32 %v1222, %v1261
    %v1263 = vpop.f32.mrf.mxu0
    %v1264 = vpop.f32.mrf.mxu0
    %v1265 = vpop.f32.mrf.mxu0
    %1266 = vdwg.mxu0
    %v1267 = vld [vmem:[#allocation2 + $0x4] sm:$0x2]
    %v1268 = vunpack.c.l.bf16 %v1267
    %1269 = vrot.lane.b32.xlu0 %v1208, 32
    %v1270 = vpop.permute.xlu0 %1269
    %v1272 = vrot.slane %v1268, 2
    %v1275 = vsel %vm139, %v1270, 0
    %1277 = vmatprep.subr.bf16.mxu0 0
    %1278 = vmatpush1.bf16.msra.mxu0 0
    %1279 = vmatprep.subr.bf16.mxu0 0
    %1280 = vmatpush1.bf16.msra.mxu0 0
    %1281 = vmatprep.subr.bf16.mxu0 0
    %1282 = vmatpush1.bf16.msra.mxu0 0
    %1283 = vmatprep.subr.bf16.mxu0 0
    %1284 = vmatpush1.bf16.msra.mxu0 0
    %1285 = vmatprep.subr.bf16.mxu0 0
    %1286 = vmatpush1.bf16.msra.mxu0 0
    %1287 = vmatprep.subr.bf16.mxu0 0
    %1288 = vmatpush1.bf16.msra.mxu0 0
    %1289 = vmatprep.subr.bf16.mxu0 0
    %1290 = vmatpush1.bf16.msra.mxu0 %v276
    %1291 = vmatprep.subr.bf16.mxu0 0
    %1292 = vmatpush1.bf16.msra.mxu0 %v275
    %1293 = vmatprep.subr.bf16.mxu0 0
    %1294 = vmatpush2.bf16.msra.mxu0 0
    %1295 = vmatprep.subr.bf16.mxu0 0
    %1296 = vmatpush2.bf16.msra.mxu0 0
    %1297 = vmatprep.subr.bf16.mxu0 0
    %1298 = vmatpush2.bf16.msra.mxu0 0
    %1299 = vmatprep.subr.bf16.mxu0 0
    %1300 = vmatpush2.bf16.msra.mxu0 0
    %1301 = vmatprep.subr.bf16.mxu0 0
    %1302 = vmatpush2.bf16.msra.mxu0 0
    %1303 = vmatprep.subr.bf16.mxu0 0
    %1304 = vmatpush2.bf16.msra.mxu0 0
    %1305 = vmatprep.subr.bf16.mxu0 0
    %1306 = vmatpush2.bf16.msra.mxu0 0
    %1307 = vmatprep.subr.bf16.mxu0 0
    %1308 = vmatpush2.bf16.msra.mxu0 0
    %1309 = vmatprep.mubr.bf16.mxu0 0
    %1310 = vmatmul.mubr.bf16.gmra.mxu0 %v1275
    %v1311 = vpop.f32.mrf.mxu0
    %v1312 = vadd.f32 %v1272, %v1311
    %v1313 = vpop.f32.mrf.mxu0
    %v1314 = vpop.f32.mrf.mxu0
    %v1315 = vpop.f32.mrf.mxu0
    %1316 = vdwg.mxu0
    %v1317 = vxor.u32 %v1262, 2147483648
    %v1318 = vmul.f32 %v1317, 1.442695
    %v1319 = vpow.pop %v1318
    %v1320 = vadd.f32 %v1319, 1.0
    %v1321 = vrcp.pop %v1320
    %v1322 = vmul.f32 1.0, %v1321
    %v1323 = vtanh.pop %v1262
    %v1324 = vmul.f32 %v1322, %v1168
    %1326 = vrot.lane.b32.xlu0 %v1323, 64
    %v1327 = vpop.permute.xlu0 %1326
    %v1329 = vmul.f32 %v1322, %v1327
    %1331 = vrot.lane.b32.xlu0 %v1329, 32
    %v1332 = vpop.permute.xlu0 %1331
    %v1334 = vadd.f32 %v1324, %v1332
    %v1335 = vtanh.pop %v1334
    %1337 = vrot.lane.b32.xlu0 %v1335, 64
    %v1338 = vpop.permute.xlu0 %1337
    %v1340 = vmul.f32 %v1322, %v1338
    %v1341 = vxor.u32 %v1312, 2147483648
    %v1342 = vmul.f32 %v1341, 1.442695
    %v1343 = vpow.pop %v1342
    %v1344 = vadd.f32 %v1343, 1.0
    %v1345 = vrcp.pop %v1344
    %v1346 = vmul.f32 1.0, %v1345
    %v1347 = vtanh.pop %v1312
    %v1348 = vmul.f32 %v1346, %v1192
    %1350 = vrot.lane.b32.xlu0 %v1347, 64
    %v1351 = vpop.permute.xlu0 %1350
    %v1353 = vmul.f32 %v1346, %v1351
    %1355 = vrot.lane.b32.xlu0 %v1353, 32
    %v1356 = vpop.permute.xlu0 %1355
    %v1358 = vadd.f32 %v1348, %v1356
    %v1359 = vtanh.pop %v1358
    %1361 = vrot.lane.b32.xlu0 %v1359, 64
    %v1362 = vpop.permute.xlu0 %1361
    %v1364 = vmul.f32 %v1346, %v1362
    %v1365 = vpack.c.bf16 %v1340, %v1340
    %v1367 = vunpack.c.l.b16 %v1365
    %v1368 = vpack.c.b16 %v1367, %v1367
    %v1369 = vrot.slane %v1368, 6
    %1370 = vrot.lane.b32.xlu0 %v1369, 32
    %v1371 = vpop.permute.xlu0 %1370
    %1373 = vst.msk [vmem:[#allocation3 + $0x4] sm:$0x4] %vm713, %v1371
    %v1374 = vpack.c.bf16 %v1364, %v1364
    %v1376 = vunpack.c.l.b16 %v1374
    %v1377 = vpack.c.b16 %v1376, %v1376
    %v1378 = vrot.slane %v1377, 7
    %1379 = vrot.lane.b32.xlu0 %v1378, 64
    %v1380 = vpop.permute.xlu0 %1379
    %1382 = vst.msk [vmem:[#allocation3] sm:$0x2] %vm723, %v1380
    %v1383 = vld [vmem:[#allocation2 + $0x8] sm:$0x8]
    %v1384 = vunpack.c.l.bf16 %v1383
    %1385 = vrot.lane.b32.xlu0 %v1365, 32
    %v1386 = vpop.permute.xlu0 %1385
    %v1388 = vrot.slane %v1384, 6
    %v1391 = vsel %vm139, %v1386, 0
    %1393 = vmatprep.subr.bf16.mxu0 0
    %1394 = vmatpush1.bf16.msra.mxu0 0
    %1395 = vmatprep.subr.bf16.mxu0 0
    %1396 = vmatpush1.bf16.msra.mxu0 0
    %1397 = vmatprep.subr.bf16.mxu0 0
    %1398 = vmatpush1.bf16.msra.mxu0 0
    %1399 = vmatprep.subr.bf16.mxu0 0
    %1400 = vmatpush1.bf16.msra.mxu0 0
    %1401 = vmatprep.subr.bf16.mxu0 0
    %1402 = vmatpush1.bf16.msra.mxu0 0
    %1403 = vmatprep.subr.bf16.mxu0 0
    %1404 = vmatpush1.bf16.msra.mxu0 0
    %1405 = vmatprep.subr.bf16.mxu0 0
    %1406 = vmatpush1.bf16.msra.mxu0 %v219
    %1407 = vmatprep.subr.bf16.mxu0 0
    %1408 = vmatpush1.bf16.msra.mxu0 %v218
    %1409 = vmatprep.subr.bf16.mxu0 0
    %1410 = vmatpush2.bf16.msra.mxu0 0
    %1411 = vmatprep.subr.bf16.mxu0 0
    %1412 = vmatpush2.bf16.msra.mxu0 0
    %1413 = vmatprep.subr.bf16.mxu0 0
    %1414 = vmatpush2.bf16.msra.mxu0 0
    %1415 = vmatprep.subr.bf16.mxu0 0
    %1416 = vmatpush2.bf16.msra.mxu0 0
    %1417 = vmatprep.subr.bf16.mxu0 0
    %1418 = vmatpush2.bf16.msra.mxu0 0
    %1419 = vmatprep.subr.bf16.mxu0 0
    %1420 = vmatpush2.bf16.msra.mxu0 0
    %1421 = vmatprep.subr.bf16.mxu0 0
    %1422 = vmatpush2.bf16.msra.mxu0 0
    %1423 = vmatprep.subr.bf16.mxu0 0
    %1424 = vmatpush2.bf16.msra.mxu0 0
    %1425 = vmatprep.mubr.bf16.mxu0 0
    %1426 = vmatmul.mubr.bf16.gmra.mxu0 %v1391
    %v1427 = vpop.f32.mrf.mxu0
    %v1428 = vadd.f32 %v1388, %v1427
    %v1429 = vpop.f32.mrf.mxu0
    %v1430 = vpop.f32.mrf.mxu0
    %v1431 = vpop.f32.mrf.mxu0
    %1432 = vdwg.mxu0
    %v1433 = vld [vmem:[#allocation2 + $0x4] sm:$0x1]
    %v1434 = vunpack.c.l.bf16 %v1433
    %1435 = vrot.lane.b32.xlu0 %v1374, 32
    %v1436 = vpop.permute.xlu0 %1435
    %v1438 = vsel %vm139, %v1436, 0
    %1440 = vmatprep.subr.bf16.mxu0 0
    %1441 = vmatpush1.bf16.msra.mxu0 0
    %1442 = vmatprep.subr.bf16.mxu0 0
    %1443 = vmatpush1.bf16.msra.mxu0 0
    %1444 = vmatprep.subr.bf16.mxu0 0
    %1445 = vmatpush1.bf16.msra.mxu0 0
    %1446 = vmatprep.subr.bf16.mxu0 0
    %1447 = vmatpush1.bf16.msra.mxu0 0
    %1448 = vmatprep.subr.bf16.mxu0 0
    %1449 = vmatpush1.bf16.msra.mxu0 0
    %1450 = vmatprep.subr.bf16.mxu0 0
    %1451 = vmatpush1.bf16.msra.mxu0 0
    %1452 = vmatprep.subr.bf16.mxu0 0
    %1453 = vmatpush1.bf16.msra.mxu0 %v276
    %1454 = vmatprep.subr.bf16.mxu0 0
    %1455 = vmatpush1.bf16.msra.mxu0 %v275
    %1456 = vmatprep.subr.bf16.mxu0 0
    %1457 = vmatpush2.bf16.msra.mxu0 0
    %1458 = vmatprep.subr.bf16.mxu0 0
    %1459 = vmatpush2.bf16.msra.mxu0 0
    %1460 = vmatprep.subr.bf16.mxu0 0
    %1461 = vmatpush2.bf16.msra.mxu0 0
    %1462 = vmatprep.subr.bf16.mxu0 0
    %1463 = vmatpush2.bf16.msra.mxu0 0
    %1464 = vmatprep.subr.bf16.mxu0 0
    %1465 = vmatpush2.bf16.msra.mxu0 0
    %1466 = vmatprep.subr.bf16.mxu0 0
    %1467 = vmatpush2.bf16.msra.mxu0 0
    %1468 = vmatprep.subr.bf16.mxu0 0
    %1469 = vmatpush2.bf16.msra.mxu0 0
    %1470 = vmatprep.subr.bf16.mxu0 0
    %1471 = vmatpush2.bf16.msra.mxu0 0
    %1472 = vmatprep.mubr.bf16.mxu0 0
    %1473 = vmatmul.mubr.bf16.gmra.mxu0 %v1438
    %v1474 = vpop.f32.mrf.mxu0
    %v1475 = vadd.f32 %v1434, %v1474
    %v1476 = vpop.f32.mrf.mxu0
    %v1477 = vpop.f32.mrf.mxu0
    %v1478 = vpop.f32.mrf.mxu0
    %1479 = vdwg.mxu0
    %v1480 = vxor.u32 %v1428, 2147483648
    %v1481 = vmul.f32 %v1480, 1.442695
    %v1482 = vpow.pop %v1481
    %v1483 = vadd.f32 %v1482, 1.0
    %v1484 = vrcp.pop %v1483
    %v1485 = vmul.f32 1.0, %v1484
    %v1486 = vtanh.pop %v1428
    %v1487 = vmul.f32 %v1485, %v1334
    %1489 = vrot.lane.b32.xlu0 %v1486, 64
    %v1490 = vpop.permute.xlu0 %1489
    %v1492 = vmul.f32 %v1485, %v1490
    %1494 = vrot.lane.b32.xlu0 %v1492, 32
    %v1495 = vpop.permute.xlu0 %1494
    %v1497 = vadd.f32 %v1487, %v1495
    %v1498 = vtanh.pop %v1497
    %1500 = vrot.lane.b32.xlu0 %v1498, 64
    %v1501 = vpop.permute.xlu0 %1500
    %v1503 = vmul.f32 %v1485, %v1501
    %v1504 = vxor.u32 %v1475, 2147483648
    %v1505 = vmul.f32 %v1504, 1.442695
    %v1506 = vpow.pop %v1505
    %v1507 = vadd.f32 %v1506, 1.0
    %v1508 = vrcp.pop %v1507
    %v1509 = vmul.f32 1.0, %v1508
    %v1510 = vtanh.pop %v1475
    %v1511 = vmul.f32 %v1509, %v1358
    %1513 = vrot.lane.b32.xlu0 %v1510, 64
    %v1514 = vpop.permute.xlu0 %1513
    %v1516 = vmul.f32 %v1509, %v1514
    %1518 = vrot.lane.b32.xlu0 %v1516, 32
    %v1519 = vpop.permute.xlu0 %1518
    %v1521 = vadd.f32 %v1511, %v1519
    %v1522 = vtanh.pop %v1521
    %1524 = vrot.lane.b32.xlu0 %v1522, 64
    %v1525 = vpop.permute.xlu0 %1524
    %v1527 = vmul.f32 %v1509, %v1525
    %v1528 = vpack.c.bf16 %v1503, %v1503
    %v1530 = vunpack.c.l.b16 %v1528
    %v1531 = vpack.c.b16 %v1530, %v1530
    %v1532 = vrot.slane %v1531, 5
    %1533 = vrot.lane.b32.xlu0 %v1532, 32
    %v1534 = vpop.permute.xlu0 %1533
    %1536 = vst.msk [vmem:[#allocation3 + $0x4] sm:$0x8] %vm878, %v1534
    %v1537 = vpack.c.bf16 %v1527, %v1527
    %v1539 = vunpack.c.l.b16 %v1537
    %v1540 = vpack.c.b16 %v1539, %v1539
    %1541 = vrot.lane.b32.xlu0 %v1540, 64
    %v1542 = vpop.permute.xlu0 %1541
    %1544 = vst.msk [vmem:[#allocation3] sm:$0x1] %vm887, %v1542
    %v1545 = vld [vmem:[#allocation3] sm:$0xf]
    %v1546 = vld [vmem:[#allocation3 + $0x4] sm:$0xf]
    %v1547 = vld [vmem:[#allocation12] sm:$0xf]
    %v1548 = vld [vmem:[#allocation12 + $0x4] sm:$0xf]
    %v1549 = vld [vmem:[#allocation12 + $0x8] sm:$0xf]
    %v1550 = vld [vmem:[#allocation12 + $0xc] sm:$0xf]
    %v1551 = vld [vmem:[#allocation12 + $0x10] sm:$0xf]
    %v1552 = vld [vmem:[#allocation12 + $0x14] sm:$0xf]
    %v1553 = vld [vmem:[#allocation12 + $0x18] sm:$0xf]
    %v1554 = vld [vmem:[#allocation12 + $0x1c] sm:$0xf]
    %v1555 = vld [vmem:[%s6] sm:$0x1]
    %v1557 = vlaneseq
    %v1558 = vshrl.u32 %v1557, 7
    %v1559 = vsub.s32 0, %v1558
    %v1560 = vrot.slane %v1555, %v1559
    %v1564 = vunpack.c.l.b16 %v1545
    %v1565 = vunpack.c.l.b16 %v1546
    %v1566 = vpack.c.b16 %v1565, %v1564
    %v1575 = vunpack.c.l.b16 %v1547
    %v1576 = vunpack.c.l.b16 %v1548
    %v1577 = vunpack.c.l.b16 %v1549
    %v1578 = vunpack.c.l.b16 %v1550
    %v1579 = vunpack.c.l.b16 %v1551
    %v1580 = vunpack.c.l.b16 %v1552
    %v1581 = vunpack.c.l.b16 %v1553
    %v1582 = vunpack.c.l.b16 %v1554
    %v1583 = vpack.c.b16 %v1576, %v1575
    %v1584 = vpack.c.b16 %v1578, %v1577
    %v1585 = vpack.c.b16 %v1580, %v1579
    %v1586 = vpack.c.b16 %v1582, %v1581
    %vm1591 = vcmask 523264
    %v1593 = vsel %vm1591, %v1566, 0
    %1595 = vmatprep.subr.bf16.mxu0 0
    %1596 = vmatpush1.bf16.msra.mxu0 0
    %1597 = vmatprep.subr.bf16.mxu0 0
    %1598 = vmatpush1.bf16.msra.mxu0 0
    %1599 = vmatprep.subr.bf16.mxu0 0
    %1600 = vmatpush1.bf16.msra.mxu0 0
    %1601 = vmatprep.subr.bf16.mxu0 0
    %1602 = vmatpush1.bf16.msra.mxu0 0
    %1603 = vmatprep.subr.bf16.mxu0 0
    %1604 = vmatpush1.bf16.msra.mxu0 %v1586
    %1605 = vmatprep.subr.bf16.mxu0 0
    %1606 = vmatpush1.bf16.msra.mxu0 %v1585
    %1607 = vmatprep.subr.bf16.mxu0 0
    %1608 = vmatpush1.bf16.msra.mxu0 %v1584
    %1609 = vmatprep.subr.bf16.mxu0 0
    %1610 = vmatpush1.bf16.msra.mxu0 %v1583
    %1611 = vmatprep.subr.bf16.mxu0 0
    %1612 = vmatpush2.bf16.msra.mxu0 0
    %1613 = vmatprep.subr.bf16.mxu0 0
    %1614 = vmatpush2.bf16.msra.mxu0 0
    %1615 = vmatprep.subr.bf16.mxu0 0
    %1616 = vmatpush2.bf16.msra.mxu0 0
    %1617 = vmatprep.subr.bf16.mxu0 0
    %1618 = vmatpush2.bf16.msra.mxu0 0
    %1619 = vmatprep.subr.bf16.mxu0 0
    %1620 = vmatpush2.bf16.msra.mxu0 0
    %1621 = vmatprep.subr.bf16.mxu0 0
    %1622 = vmatpush2.bf16.msra.mxu0 0
    %1623 = vmatprep.subr.bf16.mxu0 0
    %1624 = vmatpush2.bf16.msra.mxu0 0
    %1625 = vmatprep.subr.bf16.mxu0 0
    %1626 = vmatpush2.bf16.msra.mxu0 0
    %1627 = vmatprep.mubr.bf16.mxu0 0
    %1628 = vmatmul.mubr.bf16.gmra.mxu0 %v1593
    %v1629 = vpop.f32.mrf.mxu0
    %v1630 = vadd.f32 %v1560, %v1629
    %v1631 = vpop.f32.mrf.mxu0
    %v1632 = vpop.f32.mrf.mxu0
    %v1633 = vadd.f32 %v1560, %v1632
    %v1634 = vpop.f32.mrf.mxu0
    %1635 = vdwg.mxu0
    %1636 = vst [vmem:[#allocation13] sm:$0xff] %v1630
    %1637 = vst [vmem:[#allocation13 + $0x8] sm:$0xff] %v1633
    // Predicated region
    $region50: #{tpu_custom_call.1} parent=1 // pred_check
      _
    $region51: #{tpu_custom_call.1} parent=1 // pred_check_branch
      %1639 = sbr.rel (0) target = $region53
    $region52: #{tpu_custom_call.1} parent=1 // pred_region
      %s1641 = ssub.s32 256, 256
      %1642 = vsyncadd [#allocation6], %s1641
      %s1643 = sshll.u32 [#allocation13], 4
      %s1644 = int_to_ptr.vmem [resolvable:$true] %s1643
      %1649 = dma.vmem_to_hbm [thread:$0]  %s1644, 256, %s7, [#allocation6], 128, 128, 8
    $region53: #{tpu_custom_call.1} parent=1 // pred_fallthru
      _
    // Predicated region
    $region54: #{tpu_custom_call.1} parent=1 // pred_check
      _
    $region55: #{tpu_custom_call.1} parent=1 // pred_check_branch
      %1651 = sbr.rel (0) target = $region57
    $region56: #{tpu_custom_call.1} parent=1 // pred_region
      %1652 = dma.done [#allocation6], 256
    $region57: #{tpu_custom_call.1} parent=1 // pred_fallthru
      _
    %1653 = vsyncpa [#allocation5], 1
    %1654 = vsyncpa [#allocation8], 1
    %1655 = vsyncpa [#allocation11], 1
    %1656 = vsyncpa [#allocation6], 1

</llo_original>
